<compile_context>
chip_gen: v6e
topology: v6e:2x2x1
jax: 0.10.0
libtpu: 0.0.40
codegen_flags: <defaults>
</compile_context>

<pallas_src>
import functools
import math

import jax
import jax.numpy as jnp
from jax.experimental import pallas as pl
from jax.experimental.pallas import tpu as pltpu


# ---- packed-parameter layout (static offsets into the SMEM f32[329] vector) --
_OFF_W1, _OFF_B1 = 0, 96          # w1: (16, 6),  b1: (16,)
_OFF_W2, _OFF_B2 = 112, 240       # w2: (8, 16),  b2: (8,)
_OFF_W3, _OFF_B3 = 248, 312       # w3: (8, 8),   b3: (8,)
_OFF_W4D, _OFF_B4D = 320, 328     # w4[1]-w4[0]: (8,), b4[1]-b4[0]: ()
_N_PARAMS = 329

_LAYERS = (
    (16, 6, _OFF_W1, _OFF_B1),
    (8, 16, _OFF_W2, _OFF_B2),
    (8, 8, _OFF_W3, _OFF_B3),
)


def _round_up(n, m):
    return ((n + m - 1) // m) * m


def _make_kernel(s8, n_stripes):
    """Kernel over one (6, tbs, 128) input block -> (tbs, 128) block of p0."""

    def kernel(x_ref, p_ref, out_ref):
        # p_ref: f32[329] in SMEM; scalar reads feed vector-scalar multiplies,
        # so no per-MAC lane/sublane broadcasts are materialized.

        def dense_relu(h, out_dim, in_dim, w_off, b_off):
            outs = []
            for o in range(out_dim):
                acc = jnp.full((s8, 128), p_ref[b_off + o], dtype=jnp.float32)
                for i in range(in_dim):
                    acc = acc + p_ref[w_off + o * in_dim + i] * h[i]
                outs.append(jnp.maximum(acc, 0.0))
            return outs

        def body(s, carry):
            off = pl.multiple_of(s * s8, s8)
            # 6 dense (s8, 128) feature planes for this batch stripe.
            h = [x_ref[f, pl.ds(off, s8), :] for f in range(6)]
            for (out_dim, in_dim, w_off, b_off) in _LAYERS:
                h = dense_relu(h, out_dim, in_dim, w_off, b_off)
            # Folded last layer: d = logits[1] - logits[0]
            d = jnp.full((s8, 128), p_ref[_OFF_B4D], dtype=jnp.float32)
            for i in range(8):
                d = d + p_ref[_OFF_W4D + i] * h[i]
            # 2-class softmax class-0 prob == sigmoid(-d); no cross-lane reductions.
            out_ref[pl.ds(off, s8), :] = 1.0 / (1.0 + jnp.exp(d))
            return carry

        jax.lax.fori_loop(0, n_stripes, body, jnp.int32(0))

    return kernel


def _choose_tiles(batch, tbs_max):
    """Pick (block sublane-groups, stripe height, padded #groups)."""
    nb = max(1, -(-batch // 128))            # number of 128-lane batch groups
    tbs = max(8, _round_up(tbs_max, 8))
    if nb >= 16:                             # keep >= 2 grid steps (v7x megacore)
        tbs = min(tbs, _round_up(-(-nb // 2), 64))
    tbs = max(8, min(tbs, _round_up(nb, 8)))
    s8 = 8 * math.gcd(tbs // 8, 8)           # stripe height: 8..64 sublanes
    nbp = _round_up(nb, tbs)
    return tbs, s8, nbp


@functools.partial(jax.jit, static_argnames=("tbs",))
def eorp_forward(x, packed_params, *, tbs=512):
    """x: (B, 6) f32 (PyTorch layout); returns (B, 2) softmax probabilities."""
    B = x.shape[0]
    tbs, s8, nbp = _choose_tiles(B, tbs)
    Bp = nbp * 128

    # One fused layout pass under jit: pad batch, go batch-major -> feature planes.
    xp = jnp.pad(x.astype(jnp.float32), ((0, Bp - B), (0, 0)))
    xt = xp.T.reshape(6, nbp, 128)

    p0 = pl.pallas_call(
        _make_kernel(s8, tbs // s8),
        out_shape=jax.ShapeDtypeStruct((nbp, 128), jnp.float32),
        grid=(nbp // tbs,),
        in_specs=[
            pl.BlockSpec((6, tbs, 128), lambda i: (0, i, 0)),
            pl.BlockSpec(memory_space=pltpu.MemorySpace.SMEM),  # packed params
        ],
        out_specs=pl.BlockSpec((tbs, 128), lambda i: (i, 0)),
        compiler_params=pltpu.CompilerParams(
            dimension_semantics=("parallel",)),
    )(xt, packed_params)

    p0 = p0.reshape(-1)[:B]
    return jnp.stack([p0, 1.0 - p0], axis=-1)


def init_params(key):
    """PyTorch-style uniform(+/- 1/sqrt(fan_in)) init.

    Weights stored (out_features, in_features) (PyTorch convention),
    biases (out_features,).
    """
    dims = [(6, 16), (16, 8), (8, 8), (8, 2)]
    params = []
    for fin, fout in dims:
        kw, kb, key = jax.random.split(key, 3)
        bound = 1.0 / math.sqrt(fin)
        w = jax.random.uniform(kw, (fout, fin), jnp.float32, -bound, bound)
        b = jax.random.uniform(kb, (fout,), jnp.float32, -bound, bound)
        params.append((w, b))
    return params


def pack_params(params):
    """Pack all layers into one f32[329] vector (SMEM-resident in the kernel)."""
    (w1, b1), (w2, b2), (w3, b3), (w4, b4) = params
    pieces = [w1.reshape(-1), b1.reshape(-1),
              w2.reshape(-1), b2.reshape(-1),
              w3.reshape(-1), b3.reshape(-1),
              (w4[1] - w4[0]).reshape(-1),            # folded final layer
              (b4[1] - b4[0]).reshape(1)]
    packed = jnp.concatenate([p.astype(jnp.float32) for p in pieces])
    assert packed.shape == (_N_PARAMS,)
    return packed


def reference_forward(x, params):
    h = x.astype(jnp.float32)
    for i, (w, b) in enumerate(params):
        h = h @ w.T + b
        if i < 3:
            h = jnp.maximum(h, 0.0)
    return jax.nn.softmax(h, axis=-1)


if __name__ == "__main__":
    key = jax.random.PRNGKey(0)
    kp, kx = jax.random.split(key)
    params = init_params(kp)
    packed = pack_params(params)

    ok = True
    # tiny (heavily padded), medium single-tile, multi-tile + multi-stripe + ragged pad
    for B in (8, 1000, 20000):
        kx, sub = jax.random.split(kx)
        x = jax.random.normal(sub, (B, 6), jnp.float32)
        out = jax.block_until_ready(eorp_forward(x, packed))
        ref = reference_forward(x, params)
        ok &= out.shape == (B, 2)
        ok &= bool(jnp.allclose(out, ref, atol=1e-5))
        ok &= bool(jnp.allclose(jnp.sum(out, axis=-1), 1.0, atol=1e-5))

    assert ok, "mismatch vs JAX reference"
    print("KERNEL_OK")
</pallas_src>

<mosaic_0001>
module attributes {stable_mosaic.version = 11 : i64} {
  func.func @kernel(%arg0: i32, %arg1: memref<6x8x128xf32, #tpu.memory_space<vmem>>, %arg2: memref<329xf32, #tpu.memory_space<smem>>, %arg3: memref<8x128xf32, #tpu.memory_space<vmem>>) attributes {dimension_semantics = [#tpu.dimension_semantics<parallel>], iteration_bounds = array<i64: 1>, scalar_prefetch = 0 : i64, scratch_operands = 0 : i64, tpu.core_type = #tpu.core_type<tc>, window_params = [{transform_indices = @transform_0, window_bounds = array<i64: 6, 8, 128>}, {transform_indices = @transform_1, window_bounds = array<i64: 329>}, {transform_indices = @transform_2, window_bounds = array<i64: 8, 128>}]} {
    %c0_i32 = arith.constant 0 : i32
    %c8_i32 = arith.constant 8 : i32
    %0 = arith.muli %c0_i32, %c8_i32 : i32
    %1 = tpu.assume_multiple %0, 8 : i32
    %c0 = arith.constant 0 : index
    %2 = arith.index_cast %1 : i32 to index
    %c0_0 = arith.constant 0 : index
    %3 = vector.load %arg1[%c0, %2, %c0_0] : memref<6x8x128xf32, #tpu.memory_space<vmem>>, vector<1x8x128xf32>
    %4 = vector.shape_cast %3 : vector<1x8x128xf32> to vector<8x128xf32>
    %c1 = arith.constant 1 : index
    %5 = arith.index_cast %1 : i32 to index
    %c0_1 = arith.constant 0 : index
    %6 = vector.load %arg1[%c1, %5, %c0_1] : memref<6x8x128xf32, #tpu.memory_space<vmem>>, vector<1x8x128xf32>
    %7 = vector.shape_cast %6 : vector<1x8x128xf32> to vector<8x128xf32>
    %c2 = arith.constant 2 : index
    %8 = arith.index_cast %1 : i32 to index
    %c0_2 = arith.constant 0 : index
    %9 = vector.load %arg1[%c2, %8, %c0_2] : memref<6x8x128xf32, #tpu.memory_space<vmem>>, vector<1x8x128xf32>
    %10 = vector.shape_cast %9 : vector<1x8x128xf32> to vector<8x128xf32>
    %c3 = arith.constant 3 : index
    %11 = arith.index_cast %1 : i32 to index
    %c0_3 = arith.constant 0 : index
    %12 = vector.load %arg1[%c3, %11, %c0_3] : memref<6x8x128xf32, #tpu.memory_space<vmem>>, vector<1x8x128xf32>
    %13 = vector.shape_cast %12 : vector<1x8x128xf32> to vector<8x128xf32>
    %c4 = arith.constant 4 : index
    %14 = arith.index_cast %1 : i32 to index
    %c0_4 = arith.constant 0 : index
    %15 = vector.load %arg1[%c4, %14, %c0_4] : memref<6x8x128xf32, #tpu.memory_space<vmem>>, vector<1x8x128xf32>
    %16 = vector.shape_cast %15 : vector<1x8x128xf32> to vector<8x128xf32>
    %c5 = arith.constant 5 : index
    %17 = arith.index_cast %1 : i32 to index
    %c0_5 = arith.constant 0 : index
    %18 = vector.load %arg1[%c5, %17, %c0_5] : memref<6x8x128xf32, #tpu.memory_space<vmem>>, vector<1x8x128xf32>
    %19 = vector.shape_cast %18 : vector<1x8x128xf32> to vector<8x128xf32>
    %c96 = arith.constant 96 : index
    %20 = memref.load %arg2[%c96] : memref<329xf32, #tpu.memory_space<smem>>
    %21 = vector.broadcast %20 : f32 to vector<8x128xf32>
    %c0_6 = arith.constant 0 : index
    %22 = memref.load %arg2[%c0_6] : memref<329xf32, #tpu.memory_space<smem>>
    %23 = vector.broadcast %22 : f32 to vector<8x128xf32>
    %24 = arith.mulf %23, %4 : vector<8x128xf32>
    %25 = arith.addf %21, %24 : vector<8x128xf32>
    %c1_7 = arith.constant 1 : index
    %26 = memref.load %arg2[%c1_7] : memref<329xf32, #tpu.memory_space<smem>>
    %27 = vector.broadcast %26 : f32 to vector<8x128xf32>
    %28 = arith.mulf %27, %7 : vector<8x128xf32>
    %29 = arith.addf %25, %28 : vector<8x128xf32>
    %c2_8 = arith.constant 2 : index
    %30 = memref.load %arg2[%c2_8] : memref<329xf32, #tpu.memory_space<smem>>
    %31 = vector.broadcast %30 : f32 to vector<8x128xf32>
    %32 = arith.mulf %31, %10 : vector<8x128xf32>
    %33 = arith.addf %29, %32 : vector<8x128xf32>
    %c3_9 = arith.constant 3 : index
    %34 = memref.load %arg2[%c3_9] : memref<329xf32, #tpu.memory_space<smem>>
    %35 = vector.broadcast %34 : f32 to vector<8x128xf32>
    %36 = arith.mulf %35, %13 : vector<8x128xf32>
    %37 = arith.addf %33, %36 : vector<8x128xf32>
    %c4_10 = arith.constant 4 : index
    %38 = memref.load %arg2[%c4_10] : memref<329xf32, #tpu.memory_space<smem>>
    %39 = vector.broadcast %38 : f32 to vector<8x128xf32>
    %40 = arith.mulf %39, %16 : vector<8x128xf32>
    %41 = arith.addf %37, %40 : vector<8x128xf32>
    %c5_11 = arith.constant 5 : index
    %42 = memref.load %arg2[%c5_11] : memref<329xf32, #tpu.memory_space<smem>>
    %43 = vector.broadcast %42 : f32 to vector<8x128xf32>
    %44 = arith.mulf %43, %19 : vector<8x128xf32>
    %45 = arith.addf %41, %44 : vector<8x128xf32>
    %cst = arith.constant 0.000000e+00 : f32
    %46 = vector.broadcast %cst : f32 to vector<8x128xf32>
    %47 = arith.maximumf %45, %46 : vector<8x128xf32>
    %c97 = arith.constant 97 : index
    %48 = memref.load %arg2[%c97] : memref<329xf32, #tpu.memory_space<smem>>
    %49 = vector.broadcast %48 : f32 to vector<8x128xf32>
    %c6 = arith.constant 6 : index
    %50 = memref.load %arg2[%c6] : memref<329xf32, #tpu.memory_space<smem>>
    %51 = vector.broadcast %50 : f32 to vector<8x128xf32>
    %52 = arith.mulf %51, %4 : vector<8x128xf32>
    %53 = arith.addf %49, %52 : vector<8x128xf32>
    %c7 = arith.constant 7 : index
    %54 = memref.load %arg2[%c7] : memref<329xf32, #tpu.memory_space<smem>>
    %55 = vector.broadcast %54 : f32 to vector<8x128xf32>
    %56 = arith.mulf %55, %7 : vector<8x128xf32>
    %57 = arith.addf %53, %56 : vector<8x128xf32>
    %c8 = arith.constant 8 : index
    %58 = memref.load %arg2[%c8] : memref<329xf32, #tpu.memory_space<smem>>
    %59 = vector.broadcast %58 : f32 to vector<8x128xf32>
    %60 = arith.mulf %59, %10 : vector<8x128xf32>
    %61 = arith.addf %57, %60 : vector<8x128xf32>
    %c9 = arith.constant 9 : index
    %62 = memref.load %arg2[%c9] : memref<329xf32, #tpu.memory_space<smem>>
    %63 = vector.broadcast %62 : f32 to vector<8x128xf32>
    %64 = arith.mulf %63, %13 : vector<8x128xf32>
    %65 = arith.addf %61, %64 : vector<8x128xf32>
    %c10 = arith.constant 10 : index
    %66 = memref.load %arg2[%c10] : memref<329xf32, #tpu.memory_space<smem>>
    %67 = vector.broadcast %66 : f32 to vector<8x128xf32>
    %68 = arith.mulf %67, %16 : vector<8x128xf32>
    %69 = arith.addf %65, %68 : vector<8x128xf32>
    %c11 = arith.constant 11 : index
    %70 = memref.load %arg2[%c11] : memref<329xf32, #tpu.memory_space<smem>>
    %71 = vector.broadcast %70 : f32 to vector<8x128xf32>
    %72 = arith.mulf %71, %19 : vector<8x128xf32>
    %73 = arith.addf %69, %72 : vector<8x128xf32>
    %cst_12 = arith.constant 0.000000e+00 : f32
    %74 = vector.broadcast %cst_12 : f32 to vector<8x128xf32>
    %75 = arith.maximumf %73, %74 : vector<8x128xf32>
    %c98 = arith.constant 98 : index
    %76 = memref.load %arg2[%c98] : memref<329xf32, #tpu.memory_space<smem>>
    %77 = vector.broadcast %76 : f32 to vector<8x128xf32>
    %c12 = arith.constant 12 : index
    %78 = memref.load %arg2[%c12] : memref<329xf32, #tpu.memory_space<smem>>
    %79 = vector.broadcast %78 : f32 to vector<8x128xf32>
    %80 = arith.mulf %79, %4 : vector<8x128xf32>
    %81 = arith.addf %77, %80 : vector<8x128xf32>
    %c13 = arith.constant 13 : index
    %82 = memref.load %arg2[%c13] : memref<329xf32, #tpu.memory_space<smem>>
    %83 = vector.broadcast %82 : f32 to vector<8x128xf32>
    %84 = arith.mulf %83, %7 : vector<8x128xf32>
    %85 = arith.addf %81, %84 : vector<8x128xf32>
    %c14 = arith.constant 14 : index
    %86 = memref.load %arg2[%c14] : memref<329xf32, #tpu.memory_space<smem>>
    %87 = vector.broadcast %86 : f32 to vector<8x128xf32>
    %88 = arith.mulf %87, %10 : vector<8x128xf32>
    %89 = arith.addf %85, %88 : vector<8x128xf32>
    %c15 = arith.constant 15 : index
    %90 = memref.load %arg2[%c15] : memref<329xf32, #tpu.memory_space<smem>>
    %91 = vector.broadcast %90 : f32 to vector<8x128xf32>
    %92 = arith.mulf %91, %13 : vector<8x128xf32>
    %93 = arith.addf %89, %92 : vector<8x128xf32>
    %c16 = arith.constant 16 : index
    %94 = memref.load %arg2[%c16] : memref<329xf32, #tpu.memory_space<smem>>
    %95 = vector.broadcast %94 : f32 to vector<8x128xf32>
    %96 = arith.mulf %95, %16 : vector<8x128xf32>
    %97 = arith.addf %93, %96 : vector<8x128xf32>
    %c17 = arith.constant 17 : index
    %98 = memref.load %arg2[%c17] : memref<329xf32, #tpu.memory_space<smem>>
    %99 = vector.broadcast %98 : f32 to vector<8x128xf32>
    %100 = arith.mulf %99, %19 : vector<8x128xf32>
    %101 = arith.addf %97, %100 : vector<8x128xf32>
    %cst_13 = arith.constant 0.000000e+00 : f32
    %102 = vector.broadcast %cst_13 : f32 to vector<8x128xf32>
    %103 = arith.maximumf %101, %102 : vector<8x128xf32>
    %c99 = arith.constant 99 : index
    %104 = memref.load %arg2[%c99] : memref<329xf32, #tpu.memory_space<smem>>
    %105 = vector.broadcast %104 : f32 to vector<8x128xf32>
    %c18 = arith.constant 18 : index
    %106 = memref.load %arg2[%c18] : memref<329xf32, #tpu.memory_space<smem>>
    %107 = vector.broadcast %106 : f32 to vector<8x128xf32>
    %108 = arith.mulf %107, %4 : vector<8x128xf32>
    %109 = arith.addf %105, %108 : vector<8x128xf32>
    %c19 = arith.constant 19 : index
    %110 = memref.load %arg2[%c19] : memref<329xf32, #tpu.memory_space<smem>>
    %111 = vector.broadcast %110 : f32 to vector<8x128xf32>
    %112 = arith.mulf %111, %7 : vector<8x128xf32>
    %113 = arith.addf %109, %112 : vector<8x128xf32>
    %c20 = arith.constant 20 : index
    %114 = memref.load %arg2[%c20] : memref<329xf32, #tpu.memory_space<smem>>
    %115 = vector.broadcast %114 : f32 to vector<8x128xf32>
    %116 = arith.mulf %115, %10 : vector<8x128xf32>
    %117 = arith.addf %113, %116 : vector<8x128xf32>
    %c21 = arith.constant 21 : index
    %118 = memref.load %arg2[%c21] : memref<329xf32, #tpu.memory_space<smem>>
    %119 = vector.broadcast %118 : f32 to vector<8x128xf32>
    %120 = arith.mulf %119, %13 : vector<8x128xf32>
    %121 = arith.addf %117, %120 : vector<8x128xf32>
    %c22 = arith.constant 22 : index
    %122 = memref.load %arg2[%c22] : memref<329xf32, #tpu.memory_space<smem>>
    %123 = vector.broadcast %122 : f32 to vector<8x128xf32>
    %124 = arith.mulf %123, %16 : vector<8x128xf32>
    %125 = arith.addf %121, %124 : vector<8x128xf32>
    %c23 = arith.constant 23 : index
    %126 = memref.load %arg2[%c23] : memref<329xf32, #tpu.memory_space<smem>>
    %127 = vector.broadcast %126 : f32 to vector<8x128xf32>
    %128 = arith.mulf %127, %19 : vector<8x128xf32>
    %129 = arith.addf %125, %128 : vector<8x128xf32>
    %cst_14 = arith.constant 0.000000e+00 : f32
    %130 = vector.broadcast %cst_14 : f32 to vector<8x128xf32>
    %131 = arith.maximumf %129, %130 : vector<8x128xf32>
    %c100 = arith.constant 100 : index
    %132 = memref.load %arg2[%c100] : memref<329xf32, #tpu.memory_space<smem>>
    %133 = vector.broadcast %132 : f32 to vector<8x128xf32>
    %c24 = arith.constant 24 : index
    %134 = memref.load %arg2[%c24] : memref<329xf32, #tpu.memory_space<smem>>
    %135 = vector.broadcast %134 : f32 to vector<8x128xf32>
    %136 = arith.mulf %135, %4 : vector<8x128xf32>
    %137 = arith.addf %133, %136 : vector<8x128xf32>
    %c25 = arith.constant 25 : index
    %138 = memref.load %arg2[%c25] : memref<329xf32, #tpu.memory_space<smem>>
    %139 = vector.broadcast %138 : f32 to vector<8x128xf32>
    %140 = arith.mulf %139, %7 : vector<8x128xf32>
    %141 = arith.addf %137, %140 : vector<8x128xf32>
    %c26 = arith.constant 26 : index
    %142 = memref.load %arg2[%c26] : memref<329xf32, #tpu.memory_space<smem>>
    %143 = vector.broadcast %142 : f32 to vector<8x128xf32>
    %144 = arith.mulf %143, %10 : vector<8x128xf32>
    %145 = arith.addf %141, %144 : vector<8x128xf32>
    %c27 = arith.constant 27 : index
    %146 = memref.load %arg2[%c27] : memref<329xf32, #tpu.memory_space<smem>>
    %147 = vector.broadcast %146 : f32 to vector<8x128xf32>
    %148 = arith.mulf %147, %13 : vector<8x128xf32>
    %149 = arith.addf %145, %148 : vector<8x128xf32>
    %c28 = arith.constant 28 : index
    %150 = memref.load %arg2[%c28] : memref<329xf32, #tpu.memory_space<smem>>
    %151 = vector.broadcast %150 : f32 to vector<8x128xf32>
    %152 = arith.mulf %151, %16 : vector<8x128xf32>
    %153 = arith.addf %149, %152 : vector<8x128xf32>
    %c29 = arith.constant 29 : index
    %154 = memref.load %arg2[%c29] : memref<329xf32, #tpu.memory_space<smem>>
    %155 = vector.broadcast %154 : f32 to vector<8x128xf32>
    %156 = arith.mulf %155, %19 : vector<8x128xf32>
    %157 = arith.addf %153, %156 : vector<8x128xf32>
    %cst_15 = arith.constant 0.000000e+00 : f32
    %158 = vector.broadcast %cst_15 : f32 to vector<8x128xf32>
    %159 = arith.maximumf %157, %158 : vector<8x128xf32>
    %c101 = arith.constant 101 : index
    %160 = memref.load %arg2[%c101] : memref<329xf32, #tpu.memory_space<smem>>
    %161 = vector.broadcast %160 : f32 to vector<8x128xf32>
    %c30 = arith.constant 30 : index
    %162 = memref.load %arg2[%c30] : memref<329xf32, #tpu.memory_space<smem>>
    %163 = vector.broadcast %162 : f32 to vector<8x128xf32>
    %164 = arith.mulf %163, %4 : vector<8x128xf32>
    %165 = arith.addf %161, %164 : vector<8x128xf32>
    %c31 = arith.constant 31 : index
    %166 = memref.load %arg2[%c31] : memref<329xf32, #tpu.memory_space<smem>>
    %167 = vector.broadcast %166 : f32 to vector<8x128xf32>
    %168 = arith.mulf %167, %7 : vector<8x128xf32>
    %169 = arith.addf %165, %168 : vector<8x128xf32>
    %c32 = arith.constant 32 : index
    %170 = memref.load %arg2[%c32] : memref<329xf32, #tpu.memory_space<smem>>
    %171 = vector.broadcast %170 : f32 to vector<8x128xf32>
    %172 = arith.mulf %171, %10 : vector<8x128xf32>
    %173 = arith.addf %169, %172 : vector<8x128xf32>
    %c33 = arith.constant 33 : index
    %174 = memref.load %arg2[%c33] : memref<329xf32, #tpu.memory_space<smem>>
    %175 = vector.broadcast %174 : f32 to vector<8x128xf32>
    %176 = arith.mulf %175, %13 : vector<8x128xf32>
    %177 = arith.addf %173, %176 : vector<8x128xf32>
    %c34 = arith.constant 34 : index
    %178 = memref.load %arg2[%c34] : memref<329xf32, #tpu.memory_space<smem>>
    %179 = vector.broadcast %178 : f32 to vector<8x128xf32>
    %180 = arith.mulf %179, %16 : vector<8x128xf32>
    %181 = arith.addf %177, %180 : vector<8x128xf32>
    %c35 = arith.constant 35 : index
    %182 = memref.load %arg2[%c35] : memref<329xf32, #tpu.memory_space<smem>>
    %183 = vector.broadcast %182 : f32 to vector<8x128xf32>
    %184 = arith.mulf %183, %19 : vector<8x128xf32>
    %185 = arith.addf %181, %184 : vector<8x128xf32>
    %cst_16 = arith.constant 0.000000e+00 : f32
    %186 = vector.broadcast %cst_16 : f32 to vector<8x128xf32>
    %187 = arith.maximumf %185, %186 : vector<8x128xf32>
    %c102 = arith.constant 102 : index
    %188 = memref.load %arg2[%c102] : memref<329xf32, #tpu.memory_space<smem>>
    %189 = vector.broadcast %188 : f32 to vector<8x128xf32>
    %c36 = arith.constant 36 : index
    %190 = memref.load %arg2[%c36] : memref<329xf32, #tpu.memory_space<smem>>
    %191 = vector.broadcast %190 : f32 to vector<8x128xf32>
    %192 = arith.mulf %191, %4 : vector<8x128xf32>
    %193 = arith.addf %189, %192 : vector<8x128xf32>
    %c37 = arith.constant 37 : index
    %194 = memref.load %arg2[%c37] : memref<329xf32, #tpu.memory_space<smem>>
    %195 = vector.broadcast %194 : f32 to vector<8x128xf32>
    %196 = arith.mulf %195, %7 : vector<8x128xf32>
    %197 = arith.addf %193, %196 : vector<8x128xf32>
    %c38 = arith.constant 38 : index
    %198 = memref.load %arg2[%c38] : memref<329xf32, #tpu.memory_space<smem>>
    %199 = vector.broadcast %198 : f32 to vector<8x128xf32>
    %200 = arith.mulf %199, %10 : vector<8x128xf32>
    %201 = arith.addf %197, %200 : vector<8x128xf32>
    %c39 = arith.constant 39 : index
    %202 = memref.load %arg2[%c39] : memref<329xf32, #tpu.memory_space<smem>>
    %203 = vector.broadcast %202 : f32 to vector<8x128xf32>
    %204 = arith.mulf %203, %13 : vector<8x128xf32>
    %205 = arith.addf %201, %204 : vector<8x128xf32>
    %c40 = arith.constant 40 : index
    %206 = memref.load %arg2[%c40] : memref<329xf32, #tpu.memory_space<smem>>
    %207 = vector.broadcast %206 : f32 to vector<8x128xf32>
    %208 = arith.mulf %207, %16 : vector<8x128xf32>
    %209 = arith.addf %205, %208 : vector<8x128xf32>
    %c41 = arith.constant 41 : index
    %210 = memref.load %arg2[%c41] : memref<329xf32, #tpu.memory_space<smem>>
    %211 = vector.broadcast %210 : f32 to vector<8x128xf32>
    %212 = arith.mulf %211, %19 : vector<8x128xf32>
    %213 = arith.addf %209, %212 : vector<8x128xf32>
    %cst_17 = arith.constant 0.000000e+00 : f32
    %214 = vector.broadcast %cst_17 : f32 to vector<8x128xf32>
    %215 = arith.maximumf %213, %214 : vector<8x128xf32>
    %c103 = arith.constant 103 : index
    %216 = memref.load %arg2[%c103] : memref<329xf32, #tpu.memory_space<smem>>
    %217 = vector.broadcast %216 : f32 to vector<8x128xf32>
    %c42 = arith.constant 42 : index
    %218 = memref.load %arg2[%c42] : memref<329xf32, #tpu.memory_space<smem>>
    %219 = vector.broadcast %218 : f32 to vector<8x128xf32>
    %220 = arith.mulf %219, %4 : vector<8x128xf32>
    %221 = arith.addf %217, %220 : vector<8x128xf32>
    %c43 = arith.constant 43 : index
    %222 = memref.load %arg2[%c43] : memref<329xf32, #tpu.memory_space<smem>>
    %223 = vector.broadcast %222 : f32 to vector<8x128xf32>
    %224 = arith.mulf %223, %7 : vector<8x128xf32>
    %225 = arith.addf %221, %224 : vector<8x128xf32>
    %c44 = arith.constant 44 : index
    %226 = memref.load %arg2[%c44] : memref<329xf32, #tpu.memory_space<smem>>
    %227 = vector.broadcast %226 : f32 to vector<8x128xf32>
    %228 = arith.mulf %227, %10 : vector<8x128xf32>
    %229 = arith.addf %225, %228 : vector<8x128xf32>
    %c45 = arith.constant 45 : index
    %230 = memref.load %arg2[%c45] : memref<329xf32, #tpu.memory_space<smem>>
    %231 = vector.broadcast %230 : f32 to vector<8x128xf32>
    %232 = arith.mulf %231, %13 : vector<8x128xf32>
    %233 = arith.addf %229, %232 : vector<8x128xf32>
    %c46 = arith.constant 46 : index
    %234 = memref.load %arg2[%c46] : memref<329xf32, #tpu.memory_space<smem>>
    %235 = vector.broadcast %234 : f32 to vector<8x128xf32>
    %236 = arith.mulf %235, %16 : vector<8x128xf32>
    %237 = arith.addf %233, %236 : vector<8x128xf32>
    %c47 = arith.constant 47 : index
    %238 = memref.load %arg2[%c47] : memref<329xf32, #tpu.memory_space<smem>>
    %239 = vector.broadcast %238 : f32 to vector<8x128xf32>
    %240 = arith.mulf %239, %19 : vector<8x128xf32>
    %241 = arith.addf %237, %240 : vector<8x128xf32>
    %cst_18 = arith.constant 0.000000e+00 : f32
    %242 = vector.broadcast %cst_18 : f32 to vector<8x128xf32>
    %243 = arith.maximumf %241, %242 : vector<8x128xf32>
    %c104 = arith.constant 104 : index
    %244 = memref.load %arg2[%c104] : memref<329xf32, #tpu.memory_space<smem>>
    %245 = vector.broadcast %244 : f32 to vector<8x128xf32>
    %c48 = arith.constant 48 : index
    %246 = memref.load %arg2[%c48] : memref<329xf32, #tpu.memory_space<smem>>
    %247 = vector.broadcast %246 : f32 to vector<8x128xf32>
    %248 = arith.mulf %247, %4 : vector<8x128xf32>
    %249 = arith.addf %245, %248 : vector<8x128xf32>
    %c49 = arith.constant 49 : index
    %250 = memref.load %arg2[%c49] : memref<329xf32, #tpu.memory_space<smem>>
    %251 = vector.broadcast %250 : f32 to vector<8x128xf32>
    %252 = arith.mulf %251, %7 : vector<8x128xf32>
    %253 = arith.addf %249, %252 : vector<8x128xf32>
    %c50 = arith.constant 50 : index
    %254 = memref.load %arg2[%c50] : memref<329xf32, #tpu.memory_space<smem>>
    %255 = vector.broadcast %254 : f32 to vector<8x128xf32>
    %256 = arith.mulf %255, %10 : vector<8x128xf32>
    %257 = arith.addf %253, %256 : vector<8x128xf32>
    %c51 = arith.constant 51 : index
    %258 = memref.load %arg2[%c51] : memref<329xf32, #tpu.memory_space<smem>>
    %259 = vector.broadcast %258 : f32 to vector<8x128xf32>
    %260 = arith.mulf %259, %13 : vector<8x128xf32>
    %261 = arith.addf %257, %260 : vector<8x128xf32>
    %c52 = arith.constant 52 : index
    %262 = memref.load %arg2[%c52] : memref<329xf32, #tpu.memory_space<smem>>
    %263 = vector.broadcast %262 : f32 to vector<8x128xf32>
    %264 = arith.mulf %263, %16 : vector<8x128xf32>
    %265 = arith.addf %261, %264 : vector<8x128xf32>
    %c53 = arith.constant 53 : index
    %266 = memref.load %arg2[%c53] : memref<329xf32, #tpu.memory_space<smem>>
    %267 = vector.broadcast %266 : f32 to vector<8x128xf32>
    %268 = arith.mulf %267, %19 : vector<8x128xf32>
    %269 = arith.addf %265, %268 : vector<8x128xf32>
    %cst_19 = arith.constant 0.000000e+00 : f32
    %270 = vector.broadcast %cst_19 : f32 to vector<8x128xf32>
    %271 = arith.maximumf %269, %270 : vector<8x128xf32>
    %c105 = arith.constant 105 : index
    %272 = memref.load %arg2[%c105] : memref<329xf32, #tpu.memory_space<smem>>
    %273 = vector.broadcast %272 : f32 to vector<8x128xf32>
    %c54 = arith.constant 54 : index
    %274 = memref.load %arg2[%c54] : memref<329xf32, #tpu.memory_space<smem>>
    %275 = vector.broadcast %274 : f32 to vector<8x128xf32>
    %276 = arith.mulf %275, %4 : vector<8x128xf32>
    %277 = arith.addf %273, %276 : vector<8x128xf32>
    %c55 = arith.constant 55 : index
    %278 = memref.load %arg2[%c55] : memref<329xf32, #tpu.memory_space<smem>>
    %279 = vector.broadcast %278 : f32 to vector<8x128xf32>
    %280 = arith.mulf %279, %7 : vector<8x128xf32>
    %281 = arith.addf %277, %280 : vector<8x128xf32>
    %c56 = arith.constant 56 : index
    %282 = memref.load %arg2[%c56] : memref<329xf32, #tpu.memory_space<smem>>
    %283 = vector.broadcast %282 : f32 to vector<8x128xf32>
    %284 = arith.mulf %283, %10 : vector<8x128xf32>
    %285 = arith.addf %281, %284 : vector<8x128xf32>
    %c57 = arith.constant 57 : index
    %286 = memref.load %arg2[%c57] : memref<329xf32, #tpu.memory_space<smem>>
    %287 = vector.broadcast %286 : f32 to vector<8x128xf32>
    %288 = arith.mulf %287, %13 : vector<8x128xf32>
    %289 = arith.addf %285, %288 : vector<8x128xf32>
    %c58 = arith.constant 58 : index
    %290 = memref.load %arg2[%c58] : memref<329xf32, #tpu.memory_space<smem>>
    %291 = vector.broadcast %290 : f32 to vector<8x128xf32>
    %292 = arith.mulf %291, %16 : vector<8x128xf32>
    %293 = arith.addf %289, %292 : vector<8x128xf32>
    %c59 = arith.constant 59 : index
    %294 = memref.load %arg2[%c59] : memref<329xf32, #tpu.memory_space<smem>>
    %295 = vector.broadcast %294 : f32 to vector<8x128xf32>
    %296 = arith.mulf %295, %19 : vector<8x128xf32>
    %297 = arith.addf %293, %296 : vector<8x128xf32>
    %cst_20 = arith.constant 0.000000e+00 : f32
    %298 = vector.broadcast %cst_20 : f32 to vector<8x128xf32>
    %299 = arith.maximumf %297, %298 : vector<8x128xf32>
    %c106 = arith.constant 106 : index
    %300 = memref.load %arg2[%c106] : memref<329xf32, #tpu.memory_space<smem>>
    %301 = vector.broadcast %300 : f32 to vector<8x128xf32>
    %c60 = arith.constant 60 : index
    %302 = memref.load %arg2[%c60] : memref<329xf32, #tpu.memory_space<smem>>
    %303 = vector.broadcast %302 : f32 to vector<8x128xf32>
    %304 = arith.mulf %303, %4 : vector<8x128xf32>
    %305 = arith.addf %301, %304 : vector<8x128xf32>
    %c61 = arith.constant 61 : index
    %306 = memref.load %arg2[%c61] : memref<329xf32, #tpu.memory_space<smem>>
    %307 = vector.broadcast %306 : f32 to vector<8x128xf32>
    %308 = arith.mulf %307, %7 : vector<8x128xf32>
    %309 = arith.addf %305, %308 : vector<8x128xf32>
    %c62 = arith.constant 62 : index
    %310 = memref.load %arg2[%c62] : memref<329xf32, #tpu.memory_space<smem>>
    %311 = vector.broadcast %310 : f32 to vector<8x128xf32>
    %312 = arith.mulf %311, %10 : vector<8x128xf32>
    %313 = arith.addf %309, %312 : vector<8x128xf32>
    %c63 = arith.constant 63 : index
    %314 = memref.load %arg2[%c63] : memref<329xf32, #tpu.memory_space<smem>>
    %315 = vector.broadcast %314 : f32 to vector<8x128xf32>
    %316 = arith.mulf %315, %13 : vector<8x128xf32>
    %317 = arith.addf %313, %316 : vector<8x128xf32>
    %c64 = arith.constant 64 : index
    %318 = memref.load %arg2[%c64] : memref<329xf32, #tpu.memory_space<smem>>
    %319 = vector.broadcast %318 : f32 to vector<8x128xf32>
    %320 = arith.mulf %319, %16 : vector<8x128xf32>
    %321 = arith.addf %317, %320 : vector<8x128xf32>
    %c65 = arith.constant 65 : index
    %322 = memref.load %arg2[%c65] : memref<329xf32, #tpu.memory_space<smem>>
    %323 = vector.broadcast %322 : f32 to vector<8x128xf32>
    %324 = arith.mulf %323, %19 : vector<8x128xf32>
    %325 = arith.addf %321, %324 : vector<8x128xf32>
    %cst_21 = arith.constant 0.000000e+00 : f32
    %326 = vector.broadcast %cst_21 : f32 to vector<8x128xf32>
    %327 = arith.maximumf %325, %326 : vector<8x128xf32>
    %c107 = arith.constant 107 : index
    %328 = memref.load %arg2[%c107] : memref<329xf32, #tpu.memory_space<smem>>
    %329 = vector.broadcast %328 : f32 to vector<8x128xf32>
    %c66 = arith.constant 66 : index
    %330 = memref.load %arg2[%c66] : memref<329xf32, #tpu.memory_space<smem>>
    %331 = vector.broadcast %330 : f32 to vector<8x128xf32>
    %332 = arith.mulf %331, %4 : vector<8x128xf32>
    %333 = arith.addf %329, %332 : vector<8x128xf32>
    %c67 = arith.constant 67 : index
    %334 = memref.load %arg2[%c67] : memref<329xf32, #tpu.memory_space<smem>>
    %335 = vector.broadcast %334 : f32 to vector<8x128xf32>
    %336 = arith.mulf %335, %7 : vector<8x128xf32>
    %337 = arith.addf %333, %336 : vector<8x128xf32>
    %c68 = arith.constant 68 : index
    %338 = memref.load %arg2[%c68] : memref<329xf32, #tpu.memory_space<smem>>
    %339 = vector.broadcast %338 : f32 to vector<8x128xf32>
    %340 = arith.mulf %339, %10 : vector<8x128xf32>
    %341 = arith.addf %337, %340 : vector<8x128xf32>
    %c69 = arith.constant 69 : index
    %342 = memref.load %arg2[%c69] : memref<329xf32, #tpu.memory_space<smem>>
    %343 = vector.broadcast %342 : f32 to vector<8x128xf32>
    %344 = arith.mulf %343, %13 : vector<8x128xf32>
    %345 = arith.addf %341, %344 : vector<8x128xf32>
    %c70 = arith.constant 70 : index
    %346 = memref.load %arg2[%c70] : memref<329xf32, #tpu.memory_space<smem>>
    %347 = vector.broadcast %346 : f32 to vector<8x128xf32>
    %348 = arith.mulf %347, %16 : vector<8x128xf32>
    %349 = arith.addf %345, %348 : vector<8x128xf32>
    %c71 = arith.constant 71 : index
    %350 = memref.load %arg2[%c71] : memref<329xf32, #tpu.memory_space<smem>>
    %351 = vector.broadcast %350 : f32 to vector<8x128xf32>
    %352 = arith.mulf %351, %19 : vector<8x128xf32>
    %353 = arith.addf %349, %352 : vector<8x128xf32>
    %cst_22 = arith.constant 0.000000e+00 : f32
    %354 = vector.broadcast %cst_22 : f32 to vector<8x128xf32>
    %355 = arith.maximumf %353, %354 : vector<8x128xf32>
    %c108 = arith.constant 108 : index
    %356 = memref.load %arg2[%c108] : memref<329xf32, #tpu.memory_space<smem>>
    %357 = vector.broadcast %356 : f32 to vector<8x128xf32>
    %c72 = arith.constant 72 : index
    %358 = memref.load %arg2[%c72] : memref<329xf32, #tpu.memory_space<smem>>
    %359 = vector.broadcast %358 : f32 to vector<8x128xf32>
    %360 = arith.mulf %359, %4 : vector<8x128xf32>
    %361 = arith.addf %357, %360 : vector<8x128xf32>
    %c73 = arith.constant 73 : index
    %362 = memref.load %arg2[%c73] : memref<329xf32, #tpu.memory_space<smem>>
    %363 = vector.broadcast %362 : f32 to vector<8x128xf32>
    %364 = arith.mulf %363, %7 : vector<8x128xf32>
    %365 = arith.addf %361, %364 : vector<8x128xf32>
    %c74 = arith.constant 74 : index
    %366 = memref.load %arg2[%c74] : memref<329xf32, #tpu.memory_space<smem>>
    %367 = vector.broadcast %366 : f32 to vector<8x128xf32>
    %368 = arith.mulf %367, %10 : vector<8x128xf32>
    %369 = arith.addf %365, %368 : vector<8x128xf32>
    %c75 = arith.constant 75 : index
    %370 = memref.load %arg2[%c75] : memref<329xf32, #tpu.memory_space<smem>>
    %371 = vector.broadcast %370 : f32 to vector<8x128xf32>
    %372 = arith.mulf %371, %13 : vector<8x128xf32>
    %373 = arith.addf %369, %372 : vector<8x128xf32>
    %c76 = arith.constant 76 : index
    %374 = memref.load %arg2[%c76] : memref<329xf32, #tpu.memory_space<smem>>
    %375 = vector.broadcast %374 : f32 to vector<8x128xf32>
    %376 = arith.mulf %375, %16 : vector<8x128xf32>
    %377 = arith.addf %373, %376 : vector<8x128xf32>
    %c77 = arith.constant 77 : index
    %378 = memref.load %arg2[%c77] : memref<329xf32, #tpu.memory_space<smem>>
    %379 = vector.broadcast %378 : f32 to vector<8x128xf32>
    %380 = arith.mulf %379, %19 : vector<8x128xf32>
    %381 = arith.addf %377, %380 : vector<8x128xf32>
    %cst_23 = arith.constant 0.000000e+00 : f32
    %382 = vector.broadcast %cst_23 : f32 to vector<8x128xf32>
    %383 = arith.maximumf %381, %382 : vector<8x128xf32>
    %c109 = arith.constant 109 : index
    %384 = memref.load %arg2[%c109] : memref<329xf32, #tpu.memory_space<smem>>
    %385 = vector.broadcast %384 : f32 to vector<8x128xf32>
    %c78 = arith.constant 78 : index
    %386 = memref.load %arg2[%c78] : memref<329xf32, #tpu.memory_space<smem>>
    %387 = vector.broadcast %386 : f32 to vector<8x128xf32>
    %388 = arith.mulf %387, %4 : vector<8x128xf32>
    %389 = arith.addf %385, %388 : vector<8x128xf32>
    %c79 = arith.constant 79 : index
    %390 = memref.load %arg2[%c79] : memref<329xf32, #tpu.memory_space<smem>>
    %391 = vector.broadcast %390 : f32 to vector<8x128xf32>
    %392 = arith.mulf %391, %7 : vector<8x128xf32>
    %393 = arith.addf %389, %392 : vector<8x128xf32>
    %c80 = arith.constant 80 : index
    %394 = memref.load %arg2[%c80] : memref<329xf32, #tpu.memory_space<smem>>
    %395 = vector.broadcast %394 : f32 to vector<8x128xf32>
    %396 = arith.mulf %395, %10 : vector<8x128xf32>
    %397 = arith.addf %393, %396 : vector<8x128xf32>
    %c81 = arith.constant 81 : index
    %398 = memref.load %arg2[%c81] : memref<329xf32, #tpu.memory_space<smem>>
    %399 = vector.broadcast %398 : f32 to vector<8x128xf32>
    %400 = arith.mulf %399, %13 : vector<8x128xf32>
    %401 = arith.addf %397, %400 : vector<8x128xf32>
    %c82 = arith.constant 82 : index
    %402 = memref.load %arg2[%c82] : memref<329xf32, #tpu.memory_space<smem>>
    %403 = vector.broadcast %402 : f32 to vector<8x128xf32>
    %404 = arith.mulf %403, %16 : vector<8x128xf32>
    %405 = arith.addf %401, %404 : vector<8x128xf32>
    %c83 = arith.constant 83 : index
    %406 = memref.load %arg2[%c83] : memref<329xf32, #tpu.memory_space<smem>>
    %407 = vector.broadcast %406 : f32 to vector<8x128xf32>
    %408 = arith.mulf %407, %19 : vector<8x128xf32>
    %409 = arith.addf %405, %408 : vector<8x128xf32>
    %cst_24 = arith.constant 0.000000e+00 : f32
    %410 = vector.broadcast %cst_24 : f32 to vector<8x128xf32>
    %411 = arith.maximumf %409, %410 : vector<8x128xf32>
    %c110 = arith.constant 110 : index
    %412 = memref.load %arg2[%c110] : memref<329xf32, #tpu.memory_space<smem>>
    %413 = vector.broadcast %412 : f32 to vector<8x128xf32>
    %c84 = arith.constant 84 : index
    %414 = memref.load %arg2[%c84] : memref<329xf32, #tpu.memory_space<smem>>
    %415 = vector.broadcast %414 : f32 to vector<8x128xf32>
    %416 = arith.mulf %415, %4 : vector<8x128xf32>
    %417 = arith.addf %413, %416 : vector<8x128xf32>
    %c85 = arith.constant 85 : index
    %418 = memref.load %arg2[%c85] : memref<329xf32, #tpu.memory_space<smem>>
    %419 = vector.broadcast %418 : f32 to vector<8x128xf32>
    %420 = arith.mulf %419, %7 : vector<8x128xf32>
    %421 = arith.addf %417, %420 : vector<8x128xf32>
    %c86 = arith.constant 86 : index
    %422 = memref.load %arg2[%c86] : memref<329xf32, #tpu.memory_space<smem>>
    %423 = vector.broadcast %422 : f32 to vector<8x128xf32>
    %424 = arith.mulf %423, %10 : vector<8x128xf32>
    %425 = arith.addf %421, %424 : vector<8x128xf32>
    %c87 = arith.constant 87 : index
    %426 = memref.load %arg2[%c87] : memref<329xf32, #tpu.memory_space<smem>>
    %427 = vector.broadcast %426 : f32 to vector<8x128xf32>
    %428 = arith.mulf %427, %13 : vector<8x128xf32>
    %429 = arith.addf %425, %428 : vector<8x128xf32>
    %c88 = arith.constant 88 : index
    %430 = memref.load %arg2[%c88] : memref<329xf32, #tpu.memory_space<smem>>
    %431 = vector.broadcast %430 : f32 to vector<8x128xf32>
    %432 = arith.mulf %431, %16 : vector<8x128xf32>
    %433 = arith.addf %429, %432 : vector<8x128xf32>
    %c89 = arith.constant 89 : index
    %434 = memref.load %arg2[%c89] : memref<329xf32, #tpu.memory_space<smem>>
    %435 = vector.broadcast %434 : f32 to vector<8x128xf32>
    %436 = arith.mulf %435, %19 : vector<8x128xf32>
    %437 = arith.addf %433, %436 : vector<8x128xf32>
    %cst_25 = arith.constant 0.000000e+00 : f32
    %438 = vector.broadcast %cst_25 : f32 to vector<8x128xf32>
    %439 = arith.maximumf %437, %438 : vector<8x128xf32>
    %c111 = arith.constant 111 : index
    %440 = memref.load %arg2[%c111] : memref<329xf32, #tpu.memory_space<smem>>
    %441 = vector.broadcast %440 : f32 to vector<8x128xf32>
    %c90 = arith.constant 90 : index
    %442 = memref.load %arg2[%c90] : memref<329xf32, #tpu.memory_space<smem>>
    %443 = vector.broadcast %442 : f32 to vector<8x128xf32>
    %444 = arith.mulf %443, %4 : vector<8x128xf32>
    %445 = arith.addf %441, %444 : vector<8x128xf32>
    %c91 = arith.constant 91 : index
    %446 = memref.load %arg2[%c91] : memref<329xf32, #tpu.memory_space<smem>>
    %447 = vector.broadcast %446 : f32 to vector<8x128xf32>
    %448 = arith.mulf %447, %7 : vector<8x128xf32>
    %449 = arith.addf %445, %448 : vector<8x128xf32>
    %c92 = arith.constant 92 : index
    %450 = memref.load %arg2[%c92] : memref<329xf32, #tpu.memory_space<smem>>
    %451 = vector.broadcast %450 : f32 to vector<8x128xf32>
    %452 = arith.mulf %451, %10 : vector<8x128xf32>
    %453 = arith.addf %449, %452 : vector<8x128xf32>
    %c93 = arith.constant 93 : index
    %454 = memref.load %arg2[%c93] : memref<329xf32, #tpu.memory_space<smem>>
    %455 = vector.broadcast %454 : f32 to vector<8x128xf32>
    %456 = arith.mulf %455, %13 : vector<8x128xf32>
    %457 = arith.addf %453, %456 : vector<8x128xf32>
    %c94 = arith.constant 94 : index
    %458 = memref.load %arg2[%c94] : memref<329xf32, #tpu.memory_space<smem>>
    %459 = vector.broadcast %458 : f32 to vector<8x128xf32>
    %460 = arith.mulf %459, %16 : vector<8x128xf32>
    %461 = arith.addf %457, %460 : vector<8x128xf32>
    %c95 = arith.constant 95 : index
    %462 = memref.load %arg2[%c95] : memref<329xf32, #tpu.memory_space<smem>>
    %463 = vector.broadcast %462 : f32 to vector<8x128xf32>
    %464 = arith.mulf %463, %19 : vector<8x128xf32>
    %465 = arith.addf %461, %464 : vector<8x128xf32>
    %cst_26 = arith.constant 0.000000e+00 : f32
    %466 = vector.broadcast %cst_26 : f32 to vector<8x128xf32>
    %467 = arith.maximumf %465, %466 : vector<8x128xf32>
    %c240 = arith.constant 240 : index
    %468 = memref.load %arg2[%c240] : memref<329xf32, #tpu.memory_space<smem>>
    %469 = vector.broadcast %468 : f32 to vector<8x128xf32>
    %c112 = arith.constant 112 : index
    %470 = memref.load %arg2[%c112] : memref<329xf32, #tpu.memory_space<smem>>
    %471 = vector.broadcast %470 : f32 to vector<8x128xf32>
    %472 = arith.mulf %471, %47 : vector<8x128xf32>
    %473 = arith.addf %469, %472 : vector<8x128xf32>
    %c113 = arith.constant 113 : index
    %474 = memref.load %arg2[%c113] : memref<329xf32, #tpu.memory_space<smem>>
    %475 = vector.broadcast %474 : f32 to vector<8x128xf32>
    %476 = arith.mulf %475, %75 : vector<8x128xf32>
    %477 = arith.addf %473, %476 : vector<8x128xf32>
    %c114 = arith.constant 114 : index
    %478 = memref.load %arg2[%c114] : memref<329xf32, #tpu.memory_space<smem>>
    %479 = vector.broadcast %478 : f32 to vector<8x128xf32>
    %480 = arith.mulf %479, %103 : vector<8x128xf32>
    %481 = arith.addf %477, %480 : vector<8x128xf32>
    %c115 = arith.constant 115 : index
    %482 = memref.load %arg2[%c115] : memref<329xf32, #tpu.memory_space<smem>>
    %483 = vector.broadcast %482 : f32 to vector<8x128xf32>
    %484 = arith.mulf %483, %131 : vector<8x128xf32>
    %485 = arith.addf %481, %484 : vector<8x128xf32>
    %c116 = arith.constant 116 : index
    %486 = memref.load %arg2[%c116] : memref<329xf32, #tpu.memory_space<smem>>
    %487 = vector.broadcast %486 : f32 to vector<8x128xf32>
    %488 = arith.mulf %487, %159 : vector<8x128xf32>
    %489 = arith.addf %485, %488 : vector<8x128xf32>
    %c117 = arith.constant 117 : index
    %490 = memref.load %arg2[%c117] : memref<329xf32, #tpu.memory_space<smem>>
    %491 = vector.broadcast %490 : f32 to vector<8x128xf32>
    %492 = arith.mulf %491, %187 : vector<8x128xf32>
    %493 = arith.addf %489, %492 : vector<8x128xf32>
    %c118 = arith.constant 118 : index
    %494 = memref.load %arg2[%c118] : memref<329xf32, #tpu.memory_space<smem>>
    %495 = vector.broadcast %494 : f32 to vector<8x128xf32>
    %496 = arith.mulf %495, %215 : vector<8x128xf32>
    %497 = arith.addf %493, %496 : vector<8x128xf32>
    %c119 = arith.constant 119 : index
    %498 = memref.load %arg2[%c119] : memref<329xf32, #tpu.memory_space<smem>>
    %499 = vector.broadcast %498 : f32 to vector<8x128xf32>
    %500 = arith.mulf %499, %243 : vector<8x128xf32>
    %501 = arith.addf %497, %500 : vector<8x128xf32>
    %c120 = arith.constant 120 : index
    %502 = memref.load %arg2[%c120] : memref<329xf32, #tpu.memory_space<smem>>
    %503 = vector.broadcast %502 : f32 to vector<8x128xf32>
    %504 = arith.mulf %503, %271 : vector<8x128xf32>
    %505 = arith.addf %501, %504 : vector<8x128xf32>
    %c121 = arith.constant 121 : index
    %506 = memref.load %arg2[%c121] : memref<329xf32, #tpu.memory_space<smem>>
    %507 = vector.broadcast %506 : f32 to vector<8x128xf32>
    %508 = arith.mulf %507, %299 : vector<8x128xf32>
    %509 = arith.addf %505, %508 : vector<8x128xf32>
    %c122 = arith.constant 122 : index
    %510 = memref.load %arg2[%c122] : memref<329xf32, #tpu.memory_space<smem>>
    %511 = vector.broadcast %510 : f32 to vector<8x128xf32>
    %512 = arith.mulf %511, %327 : vector<8x128xf32>
    %513 = arith.addf %509, %512 : vector<8x128xf32>
    %c123 = arith.constant 123 : index
    %514 = memref.load %arg2[%c123] : memref<329xf32, #tpu.memory_space<smem>>
    %515 = vector.broadcast %514 : f32 to vector<8x128xf32>
    %516 = arith.mulf %515, %355 : vector<8x128xf32>
    %517 = arith.addf %513, %516 : vector<8x128xf32>
    %c124 = arith.constant 124 : index
    %518 = memref.load %arg2[%c124] : memref<329xf32, #tpu.memory_space<smem>>
    %519 = vector.broadcast %518 : f32 to vector<8x128xf32>
    %520 = arith.mulf %519, %383 : vector<8x128xf32>
    %521 = arith.addf %517, %520 : vector<8x128xf32>
    %c125 = arith.constant 125 : index
    %522 = memref.load %arg2[%c125] : memref<329xf32, #tpu.memory_space<smem>>
    %523 = vector.broadcast %522 : f32 to vector<8x128xf32>
    %524 = arith.mulf %523, %411 : vector<8x128xf32>
    %525 = arith.addf %521, %524 : vector<8x128xf32>
    %c126 = arith.constant 126 : index
    %526 = memref.load %arg2[%c126] : memref<329xf32, #tpu.memory_space<smem>>
    %527 = vector.broadcast %526 : f32 to vector<8x128xf32>
    %528 = arith.mulf %527, %439 : vector<8x128xf32>
    %529 = arith.addf %525, %528 : vector<8x128xf32>
    %c127 = arith.constant 127 : index
    %530 = memref.load %arg2[%c127] : memref<329xf32, #tpu.memory_space<smem>>
    %531 = vector.broadcast %530 : f32 to vector<8x128xf32>
    %532 = arith.mulf %531, %467 : vector<8x128xf32>
    %533 = arith.addf %529, %532 : vector<8x128xf32>
    %cst_27 = arith.constant 0.000000e+00 : f32
    %534 = vector.broadcast %cst_27 : f32 to vector<8x128xf32>
    %535 = arith.maximumf %533, %534 : vector<8x128xf32>
    %c241 = arith.constant 241 : index
    %536 = memref.load %arg2[%c241] : memref<329xf32, #tpu.memory_space<smem>>
    %537 = vector.broadcast %536 : f32 to vector<8x128xf32>
    %c128 = arith.constant 128 : index
    %538 = memref.load %arg2[%c128] : memref<329xf32, #tpu.memory_space<smem>>
    %539 = vector.broadcast %538 : f32 to vector<8x128xf32>
    %540 = arith.mulf %539, %47 : vector<8x128xf32>
    %541 = arith.addf %537, %540 : vector<8x128xf32>
    %c129 = arith.constant 129 : index
    %542 = memref.load %arg2[%c129] : memref<329xf32, #tpu.memory_space<smem>>
    %543 = vector.broadcast %542 : f32 to vector<8x128xf32>
    %544 = arith.mulf %543, %75 : vector<8x128xf32>
    %545 = arith.addf %541, %544 : vector<8x128xf32>
    %c130 = arith.constant 130 : index
    %546 = memref.load %arg2[%c130] : memref<329xf32, #tpu.memory_space<smem>>
    %547 = vector.broadcast %546 : f32 to vector<8x128xf32>
    %548 = arith.mulf %547, %103 : vector<8x128xf32>
    %549 = arith.addf %545, %548 : vector<8x128xf32>
    %c131 = arith.constant 131 : index
    %550 = memref.load %arg2[%c131] : memref<329xf32, #tpu.memory_space<smem>>
    %551 = vector.broadcast %550 : f32 to vector<8x128xf32>
    %552 = arith.mulf %551, %131 : vector<8x128xf32>
    %553 = arith.addf %549, %552 : vector<8x128xf32>
    %c132 = arith.constant 132 : index
    %554 = memref.load %arg2[%c132] : memref<329xf32, #tpu.memory_space<smem>>
    %555 = vector.broadcast %554 : f32 to vector<8x128xf32>
    %556 = arith.mulf %555, %159 : vector<8x128xf32>
    %557 = arith.addf %553, %556 : vector<8x128xf32>
    %c133 = arith.constant 133 : index
    %558 = memref.load %arg2[%c133] : memref<329xf32, #tpu.memory_space<smem>>
    %559 = vector.broadcast %558 : f32 to vector<8x128xf32>
    %560 = arith.mulf %559, %187 : vector<8x128xf32>
    %561 = arith.addf %557, %560 : vector<8x128xf32>
    %c134 = arith.constant 134 : index
    %562 = memref.load %arg2[%c134] : memref<329xf32, #tpu.memory_space<smem>>
    %563 = vector.broadcast %562 : f32 to vector<8x128xf32>
    %564 = arith.mulf %563, %215 : vector<8x128xf32>
    %565 = arith.addf %561, %564 : vector<8x128xf32>
    %c135 = arith.constant 135 : index
    %566 = memref.load %arg2[%c135] : memref<329xf32, #tpu.memory_space<smem>>
    %567 = vector.broadcast %566 : f32 to vector<8x128xf32>
    %568 = arith.mulf %567, %243 : vector<8x128xf32>
    %569 = arith.addf %565, %568 : vector<8x128xf32>
    %c136 = arith.constant 136 : index
    %570 = memref.load %arg2[%c136] : memref<329xf32, #tpu.memory_space<smem>>
    %571 = vector.broadcast %570 : f32 to vector<8x128xf32>
    %572 = arith.mulf %571, %271 : vector<8x128xf32>
    %573 = arith.addf %569, %572 : vector<8x128xf32>
    %c137 = arith.constant 137 : index
    %574 = memref.load %arg2[%c137] : memref<329xf32, #tpu.memory_space<smem>>
    %575 = vector.broadcast %574 : f32 to vector<8x128xf32>
    %576 = arith.mulf %575, %299 : vector<8x128xf32>
    %577 = arith.addf %573, %576 : vector<8x128xf32>
    %c138 = arith.constant 138 : index
    %578 = memref.load %arg2[%c138] : memref<329xf32, #tpu.memory_space<smem>>
    %579 = vector.broadcast %578 : f32 to vector<8x128xf32>
    %580 = arith.mulf %579, %327 : vector<8x128xf32>
    %581 = arith.addf %577, %580 : vector<8x128xf32>
    %c139 = arith.constant 139 : index
    %582 = memref.load %arg2[%c139] : memref<329xf32, #tpu.memory_space<smem>>
    %583 = vector.broadcast %582 : f32 to vector<8x128xf32>
    %584 = arith.mulf %583, %355 : vector<8x128xf32>
    %585 = arith.addf %581, %584 : vector<8x128xf32>
    %c140 = arith.constant 140 : index
    %586 = memref.load %arg2[%c140] : memref<329xf32, #tpu.memory_space<smem>>
    %587 = vector.broadcast %586 : f32 to vector<8x128xf32>
    %588 = arith.mulf %587, %383 : vector<8x128xf32>
    %589 = arith.addf %585, %588 : vector<8x128xf32>
    %c141 = arith.constant 141 : index
    %590 = memref.load %arg2[%c141] : memref<329xf32, #tpu.memory_space<smem>>
    %591 = vector.broadcast %590 : f32 to vector<8x128xf32>
    %592 = arith.mulf %591, %411 : vector<8x128xf32>
    %593 = arith.addf %589, %592 : vector<8x128xf32>
    %c142 = arith.constant 142 : index
    %594 = memref.load %arg2[%c142] : memref<329xf32, #tpu.memory_space<smem>>
    %595 = vector.broadcast %594 : f32 to vector<8x128xf32>
    %596 = arith.mulf %595, %439 : vector<8x128xf32>
    %597 = arith.addf %593, %596 : vector<8x128xf32>
    %c143 = arith.constant 143 : index
    %598 = memref.load %arg2[%c143] : memref<329xf32, #tpu.memory_space<smem>>
    %599 = vector.broadcast %598 : f32 to vector<8x128xf32>
    %600 = arith.mulf %599, %467 : vector<8x128xf32>
    %601 = arith.addf %597, %600 : vector<8x128xf32>
    %cst_28 = arith.constant 0.000000e+00 : f32
    %602 = vector.broadcast %cst_28 : f32 to vector<8x128xf32>
    %603 = arith.maximumf %601, %602 : vector<8x128xf32>
    %c242 = arith.constant 242 : index
    %604 = memref.load %arg2[%c242] : memref<329xf32, #tpu.memory_space<smem>>
    %605 = vector.broadcast %604 : f32 to vector<8x128xf32>
    %c144 = arith.constant 144 : index
    %606 = memref.load %arg2[%c144] : memref<329xf32, #tpu.memory_space<smem>>
    %607 = vector.broadcast %606 : f32 to vector<8x128xf32>
    %608 = arith.mulf %607, %47 : vector<8x128xf32>
    %609 = arith.addf %605, %608 : vector<8x128xf32>
    %c145 = arith.constant 145 : index
    %610 = memref.load %arg2[%c145] : memref<329xf32, #tpu.memory_space<smem>>
    %611 = vector.broadcast %610 : f32 to vector<8x128xf32>
    %612 = arith.mulf %611, %75 : vector<8x128xf32>
    %613 = arith.addf %609, %612 : vector<8x128xf32>
    %c146 = arith.constant 146 : index
    %614 = memref.load %arg2[%c146] : memref<329xf32, #tpu.memory_space<smem>>
    %615 = vector.broadcast %614 : f32 to vector<8x128xf32>
    %616 = arith.mulf %615, %103 : vector<8x128xf32>
    %617 = arith.addf %613, %616 : vector<8x128xf32>
    %c147 = arith.constant 147 : index
    %618 = memref.load %arg2[%c147] : memref<329xf32, #tpu.memory_space<smem>>
    %619 = vector.broadcast %618 : f32 to vector<8x128xf32>
    %620 = arith.mulf %619, %131 : vector<8x128xf32>
    %621 = arith.addf %617, %620 : vector<8x128xf32>
    %c148 = arith.constant 148 : index
    %622 = memref.load %arg2[%c148] : memref<329xf32, #tpu.memory_space<smem>>
    %623 = vector.broadcast %622 : f32 to vector<8x128xf32>
    %624 = arith.mulf %623, %159 : vector<8x128xf32>
    %625 = arith.addf %621, %624 : vector<8x128xf32>
    %c149 = arith.constant 149 : index
    %626 = memref.load %arg2[%c149] : memref<329xf32, #tpu.memory_space<smem>>
    %627 = vector.broadcast %626 : f32 to vector<8x128xf32>
    %628 = arith.mulf %627, %187 : vector<8x128xf32>
    %629 = arith.addf %625, %628 : vector<8x128xf32>
    %c150 = arith.constant 150 : index
    %630 = memref.load %arg2[%c150] : memref<329xf32, #tpu.memory_space<smem>>
    %631 = vector.broadcast %630 : f32 to vector<8x128xf32>
    %632 = arith.mulf %631, %215 : vector<8x128xf32>
    %633 = arith.addf %629, %632 : vector<8x128xf32>
    %c151 = arith.constant 151 : index
    %634 = memref.load %arg2[%c151] : memref<329xf32, #tpu.memory_space<smem>>
    %635 = vector.broadcast %634 : f32 to vector<8x128xf32>
    %636 = arith.mulf %635, %243 : vector<8x128xf32>
    %637 = arith.addf %633, %636 : vector<8x128xf32>
    %c152 = arith.constant 152 : index
    %638 = memref.load %arg2[%c152] : memref<329xf32, #tpu.memory_space<smem>>
    %639 = vector.broadcast %638 : f32 to vector<8x128xf32>
    %640 = arith.mulf %639, %271 : vector<8x128xf32>
    %641 = arith.addf %637, %640 : vector<8x128xf32>
    %c153 = arith.constant 153 : index
    %642 = memref.load %arg2[%c153] : memref<329xf32, #tpu.memory_space<smem>>
    %643 = vector.broadcast %642 : f32 to vector<8x128xf32>
    %644 = arith.mulf %643, %299 : vector<8x128xf32>
    %645 = arith.addf %641, %644 : vector<8x128xf32>
    %c154 = arith.constant 154 : index
    %646 = memref.load %arg2[%c154] : memref<329xf32, #tpu.memory_space<smem>>
    %647 = vector.broadcast %646 : f32 to vector<8x128xf32>
    %648 = arith.mulf %647, %327 : vector<8x128xf32>
    %649 = arith.addf %645, %648 : vector<8x128xf32>
    %c155 = arith.constant 155 : index
    %650 = memref.load %arg2[%c155] : memref<329xf32, #tpu.memory_space<smem>>
    %651 = vector.broadcast %650 : f32 to vector<8x128xf32>
    %652 = arith.mulf %651, %355 : vector<8x128xf32>
    %653 = arith.addf %649, %652 : vector<8x128xf32>
    %c156 = arith.constant 156 : index
    %654 = memref.load %arg2[%c156] : memref<329xf32, #tpu.memory_space<smem>>
    %655 = vector.broadcast %654 : f32 to vector<8x128xf32>
    %656 = arith.mulf %655, %383 : vector<8x128xf32>
    %657 = arith.addf %653, %656 : vector<8x128xf32>
    %c157 = arith.constant 157 : index
    %658 = memref.load %arg2[%c157] : memref<329xf32, #tpu.memory_space<smem>>
    %659 = vector.broadcast %658 : f32 to vector<8x128xf32>
    %660 = arith.mulf %659, %411 : vector<8x128xf32>
    %661 = arith.addf %657, %660 : vector<8x128xf32>
    %c158 = arith.constant 158 : index
    %662 = memref.load %arg2[%c158] : memref<329xf32, #tpu.memory_space<smem>>
    %663 = vector.broadcast %662 : f32 to vector<8x128xf32>
    %664 = arith.mulf %663, %439 : vector<8x128xf32>
    %665 = arith.addf %661, %664 : vector<8x128xf32>
    %c159 = arith.constant 159 : index
    %666 = memref.load %arg2[%c159] : memref<329xf32, #tpu.memory_space<smem>>
    %667 = vector.broadcast %666 : f32 to vector<8x128xf32>
    %668 = arith.mulf %667, %467 : vector<8x128xf32>
    %669 = arith.addf %665, %668 : vector<8x128xf32>
    %cst_29 = arith.constant 0.000000e+00 : f32
    %670 = vector.broadcast %cst_29 : f32 to vector<8x128xf32>
    %671 = arith.maximumf %669, %670 : vector<8x128xf32>
    %c243 = arith.constant 243 : index
    %672 = memref.load %arg2[%c243] : memref<329xf32, #tpu.memory_space<smem>>
    %673 = vector.broadcast %672 : f32 to vector<8x128xf32>
    %c160 = arith.constant 160 : index
    %674 = memref.load %arg2[%c160] : memref<329xf32, #tpu.memory_space<smem>>
    %675 = vector.broadcast %674 : f32 to vector<8x128xf32>
    %676 = arith.mulf %675, %47 : vector<8x128xf32>
    %677 = arith.addf %673, %676 : vector<8x128xf32>
    %c161 = arith.constant 161 : index
    %678 = memref.load %arg2[%c161] : memref<329xf32, #tpu.memory_space<smem>>
    %679 = vector.broadcast %678 : f32 to vector<8x128xf32>
    %680 = arith.mulf %679, %75 : vector<8x128xf32>
    %681 = arith.addf %677, %680 : vector<8x128xf32>
    %c162 = arith.constant 162 : index
    %682 = memref.load %arg2[%c162] : memref<329xf32, #tpu.memory_space<smem>>
    %683 = vector.broadcast %682 : f32 to vector<8x128xf32>
    %684 = arith.mulf %683, %103 : vector<8x128xf32>
    %685 = arith.addf %681, %684 : vector<8x128xf32>
    %c163 = arith.constant 163 : index
    %686 = memref.load %arg2[%c163] : memref<329xf32, #tpu.memory_space<smem>>
    %687 = vector.broadcast %686 : f32 to vector<8x128xf32>
    %688 = arith.mulf %687, %131 : vector<8x128xf32>
    %689 = arith.addf %685, %688 : vector<8x128xf32>
    %c164 = arith.constant 164 : index
    %690 = memref.load %arg2[%c164] : memref<329xf32, #tpu.memory_space<smem>>
    %691 = vector.broadcast %690 : f32 to vector<8x128xf32>
    %692 = arith.mulf %691, %159 : vector<8x128xf32>
    %693 = arith.addf %689, %692 : vector<8x128xf32>
    %c165 = arith.constant 165 : index
    %694 = memref.load %arg2[%c165] : memref<329xf32, #tpu.memory_space<smem>>
    %695 = vector.broadcast %694 : f32 to vector<8x128xf32>
    %696 = arith.mulf %695, %187 : vector<8x128xf32>
    %697 = arith.addf %693, %696 : vector<8x128xf32>
    %c166 = arith.constant 166 : index
    %698 = memref.load %arg2[%c166] : memref<329xf32, #tpu.memory_space<smem>>
    %699 = vector.broadcast %698 : f32 to vector<8x128xf32>
    %700 = arith.mulf %699, %215 : vector<8x128xf32>
    %701 = arith.addf %697, %700 : vector<8x128xf32>
    %c167 = arith.constant 167 : index
    %702 = memref.load %arg2[%c167] : memref<329xf32, #tpu.memory_space<smem>>
    %703 = vector.broadcast %702 : f32 to vector<8x128xf32>
    %704 = arith.mulf %703, %243 : vector<8x128xf32>
    %705 = arith.addf %701, %704 : vector<8x128xf32>
    %c168 = arith.constant 168 : index
    %706 = memref.load %arg2[%c168] : memref<329xf32, #tpu.memory_space<smem>>
    %707 = vector.broadcast %706 : f32 to vector<8x128xf32>
    %708 = arith.mulf %707, %271 : vector<8x128xf32>
    %709 = arith.addf %705, %708 : vector<8x128xf32>
    %c169 = arith.constant 169 : index
    %710 = memref.load %arg2[%c169] : memref<329xf32, #tpu.memory_space<smem>>
    %711 = vector.broadcast %710 : f32 to vector<8x128xf32>
    %712 = arith.mulf %711, %299 : vector<8x128xf32>
    %713 = arith.addf %709, %712 : vector<8x128xf32>
    %c170 = arith.constant 170 : index
    %714 = memref.load %arg2[%c170] : memref<329xf32, #tpu.memory_space<smem>>
    %715 = vector.broadcast %714 : f32 to vector<8x128xf32>
    %716 = arith.mulf %715, %327 : vector<8x128xf32>
    %717 = arith.addf %713, %716 : vector<8x128xf32>
    %c171 = arith.constant 171 : index
    %718 = memref.load %arg2[%c171] : memref<329xf32, #tpu.memory_space<smem>>
    %719 = vector.broadcast %718 : f32 to vector<8x128xf32>
    %720 = arith.mulf %719, %355 : vector<8x128xf32>
    %721 = arith.addf %717, %720 : vector<8x128xf32>
    %c172 = arith.constant 172 : index
    %722 = memref.load %arg2[%c172] : memref<329xf32, #tpu.memory_space<smem>>
    %723 = vector.broadcast %722 : f32 to vector<8x128xf32>
    %724 = arith.mulf %723, %383 : vector<8x128xf32>
    %725 = arith.addf %721, %724 : vector<8x128xf32>
    %c173 = arith.constant 173 : index
    %726 = memref.load %arg2[%c173] : memref<329xf32, #tpu.memory_space<smem>>
    %727 = vector.broadcast %726 : f32 to vector<8x128xf32>
    %728 = arith.mulf %727, %411 : vector<8x128xf32>
    %729 = arith.addf %725, %728 : vector<8x128xf32>
    %c174 = arith.constant 174 : index
    %730 = memref.load %arg2[%c174] : memref<329xf32, #tpu.memory_space<smem>>
    %731 = vector.broadcast %730 : f32 to vector<8x128xf32>
    %732 = arith.mulf %731, %439 : vector<8x128xf32>
    %733 = arith.addf %729, %732 : vector<8x128xf32>
    %c175 = arith.constant 175 : index
    %734 = memref.load %arg2[%c175] : memref<329xf32, #tpu.memory_space<smem>>
    %735 = vector.broadcast %734 : f32 to vector<8x128xf32>
    %736 = arith.mulf %735, %467 : vector<8x128xf32>
    %737 = arith.addf %733, %736 : vector<8x128xf32>
    %cst_30 = arith.constant 0.000000e+00 : f32
    %738 = vector.broadcast %cst_30 : f32 to vector<8x128xf32>
    %739 = arith.maximumf %737, %738 : vector<8x128xf32>
    %c244 = arith.constant 244 : index
    %740 = memref.load %arg2[%c244] : memref<329xf32, #tpu.memory_space<smem>>
    %741 = vector.broadcast %740 : f32 to vector<8x128xf32>
    %c176 = arith.constant 176 : index
    %742 = memref.load %arg2[%c176] : memref<329xf32, #tpu.memory_space<smem>>
    %743 = vector.broadcast %742 : f32 to vector<8x128xf32>
    %744 = arith.mulf %743, %47 : vector<8x128xf32>
    %745 = arith.addf %741, %744 : vector<8x128xf32>
    %c177 = arith.constant 177 : index
    %746 = memref.load %arg2[%c177] : memref<329xf32, #tpu.memory_space<smem>>
    %747 = vector.broadcast %746 : f32 to vector<8x128xf32>
    %748 = arith.mulf %747, %75 : vector<8x128xf32>
    %749 = arith.addf %745, %748 : vector<8x128xf32>
    %c178 = arith.constant 178 : index
    %750 = memref.load %arg2[%c178] : memref<329xf32, #tpu.memory_space<smem>>
    %751 = vector.broadcast %750 : f32 to vector<8x128xf32>
    %752 = arith.mulf %751, %103 : vector<8x128xf32>
    %753 = arith.addf %749, %752 : vector<8x128xf32>
    %c179 = arith.constant 179 : index
    %754 = memref.load %arg2[%c179] : memref<329xf32, #tpu.memory_space<smem>>
    %755 = vector.broadcast %754 : f32 to vector<8x128xf32>
    %756 = arith.mulf %755, %131 : vector<8x128xf32>
    %757 = arith.addf %753, %756 : vector<8x128xf32>
    %c180 = arith.constant 180 : index
    %758 = memref.load %arg2[%c180] : memref<329xf32, #tpu.memory_space<smem>>
    %759 = vector.broadcast %758 : f32 to vector<8x128xf32>
    %760 = arith.mulf %759, %159 : vector<8x128xf32>
    %761 = arith.addf %757, %760 : vector<8x128xf32>
    %c181 = arith.constant 181 : index
    %762 = memref.load %arg2[%c181] : memref<329xf32, #tpu.memory_space<smem>>
    %763 = vector.broadcast %762 : f32 to vector<8x128xf32>
    %764 = arith.mulf %763, %187 : vector<8x128xf32>
    %765 = arith.addf %761, %764 : vector<8x128xf32>
    %c182 = arith.constant 182 : index
    %766 = memref.load %arg2[%c182] : memref<329xf32, #tpu.memory_space<smem>>
    %767 = vector.broadcast %766 : f32 to vector<8x128xf32>
    %768 = arith.mulf %767, %215 : vector<8x128xf32>
    %769 = arith.addf %765, %768 : vector<8x128xf32>
    %c183 = arith.constant 183 : index
    %770 = memref.load %arg2[%c183] : memref<329xf32, #tpu.memory_space<smem>>
    %771 = vector.broadcast %770 : f32 to vector<8x128xf32>
    %772 = arith.mulf %771, %243 : vector<8x128xf32>
    %773 = arith.addf %769, %772 : vector<8x128xf32>
    %c184 = arith.constant 184 : index
    %774 = memref.load %arg2[%c184] : memref<329xf32, #tpu.memory_space<smem>>
    %775 = vector.broadcast %774 : f32 to vector<8x128xf32>
    %776 = arith.mulf %775, %271 : vector<8x128xf32>
    %777 = arith.addf %773, %776 : vector<8x128xf32>
    %c185 = arith.constant 185 : index
    %778 = memref.load %arg2[%c185] : memref<329xf32, #tpu.memory_space<smem>>
    %779 = vector.broadcast %778 : f32 to vector<8x128xf32>
    %780 = arith.mulf %779, %299 : vector<8x128xf32>
    %781 = arith.addf %777, %780 : vector<8x128xf32>
    %c186 = arith.constant 186 : index
    %782 = memref.load %arg2[%c186] : memref<329xf32, #tpu.memory_space<smem>>
    %783 = vector.broadcast %782 : f32 to vector<8x128xf32>
    %784 = arith.mulf %783, %327 : vector<8x128xf32>
    %785 = arith.addf %781, %784 : vector<8x128xf32>
    %c187 = arith.constant 187 : index
    %786 = memref.load %arg2[%c187] : memref<329xf32, #tpu.memory_space<smem>>
    %787 = vector.broadcast %786 : f32 to vector<8x128xf32>
    %788 = arith.mulf %787, %355 : vector<8x128xf32>
    %789 = arith.addf %785, %788 : vector<8x128xf32>
    %c188 = arith.constant 188 : index
    %790 = memref.load %arg2[%c188] : memref<329xf32, #tpu.memory_space<smem>>
    %791 = vector.broadcast %790 : f32 to vector<8x128xf32>
    %792 = arith.mulf %791, %383 : vector<8x128xf32>
    %793 = arith.addf %789, %792 : vector<8x128xf32>
    %c189 = arith.constant 189 : index
    %794 = memref.load %arg2[%c189] : memref<329xf32, #tpu.memory_space<smem>>
    %795 = vector.broadcast %794 : f32 to vector<8x128xf32>
    %796 = arith.mulf %795, %411 : vector<8x128xf32>
    %797 = arith.addf %793, %796 : vector<8x128xf32>
    %c190 = arith.constant 190 : index
    %798 = memref.load %arg2[%c190] : memref<329xf32, #tpu.memory_space<smem>>
    %799 = vector.broadcast %798 : f32 to vector<8x128xf32>
    %800 = arith.mulf %799, %439 : vector<8x128xf32>
    %801 = arith.addf %797, %800 : vector<8x128xf32>
    %c191 = arith.constant 191 : index
    %802 = memref.load %arg2[%c191] : memref<329xf32, #tpu.memory_space<smem>>
    %803 = vector.broadcast %802 : f32 to vector<8x128xf32>
    %804 = arith.mulf %803, %467 : vector<8x128xf32>
    %805 = arith.addf %801, %804 : vector<8x128xf32>
    %cst_31 = arith.constant 0.000000e+00 : f32
    %806 = vector.broadcast %cst_31 : f32 to vector<8x128xf32>
    %807 = arith.maximumf %805, %806 : vector<8x128xf32>
    %c245 = arith.constant 245 : index
    %808 = memref.load %arg2[%c245] : memref<329xf32, #tpu.memory_space<smem>>
    %809 = vector.broadcast %808 : f32 to vector<8x128xf32>
    %c192 = arith.constant 192 : index
    %810 = memref.load %arg2[%c192] : memref<329xf32, #tpu.memory_space<smem>>
    %811 = vector.broadcast %810 : f32 to vector<8x128xf32>
    %812 = arith.mulf %811, %47 : vector<8x128xf32>
    %813 = arith.addf %809, %812 : vector<8x128xf32>
    %c193 = arith.constant 193 : index
    %814 = memref.load %arg2[%c193] : memref<329xf32, #tpu.memory_space<smem>>
    %815 = vector.broadcast %814 : f32 to vector<8x128xf32>
    %816 = arith.mulf %815, %75 : vector<8x128xf32>
    %817 = arith.addf %813, %816 : vector<8x128xf32>
    %c194 = arith.constant 194 : index
    %818 = memref.load %arg2[%c194] : memref<329xf32, #tpu.memory_space<smem>>
    %819 = vector.broadcast %818 : f32 to vector<8x128xf32>
    %820 = arith.mulf %819, %103 : vector<8x128xf32>
    %821 = arith.addf %817, %820 : vector<8x128xf32>
    %c195 = arith.constant 195 : index
    %822 = memref.load %arg2[%c195] : memref<329xf32, #tpu.memory_space<smem>>
    %823 = vector.broadcast %822 : f32 to vector<8x128xf32>
    %824 = arith.mulf %823, %131 : vector<8x128xf32>
    %825 = arith.addf %821, %824 : vector<8x128xf32>
    %c196 = arith.constant 196 : index
    %826 = memref.load %arg2[%c196] : memref<329xf32, #tpu.memory_space<smem>>
    %827 = vector.broadcast %826 : f32 to vector<8x128xf32>
    %828 = arith.mulf %827, %159 : vector<8x128xf32>
    %829 = arith.addf %825, %828 : vector<8x128xf32>
    %c197 = arith.constant 197 : index
    %830 = memref.load %arg2[%c197] : memref<329xf32, #tpu.memory_space<smem>>
    %831 = vector.broadcast %830 : f32 to vector<8x128xf32>
    %832 = arith.mulf %831, %187 : vector<8x128xf32>
    %833 = arith.addf %829, %832 : vector<8x128xf32>
    %c198 = arith.constant 198 : index
    %834 = memref.load %arg2[%c198] : memref<329xf32, #tpu.memory_space<smem>>
    %835 = vector.broadcast %834 : f32 to vector<8x128xf32>
    %836 = arith.mulf %835, %215 : vector<8x128xf32>
    %837 = arith.addf %833, %836 : vector<8x128xf32>
    %c199 = arith.constant 199 : index
    %838 = memref.load %arg2[%c199] : memref<329xf32, #tpu.memory_space<smem>>
    %839 = vector.broadcast %838 : f32 to vector<8x128xf32>
    %840 = arith.mulf %839, %243 : vector<8x128xf32>
    %841 = arith.addf %837, %840 : vector<8x128xf32>
    %c200 = arith.constant 200 : index
    %842 = memref.load %arg2[%c200] : memref<329xf32, #tpu.memory_space<smem>>
    %843 = vector.broadcast %842 : f32 to vector<8x128xf32>
    %844 = arith.mulf %843, %271 : vector<8x128xf32>
    %845 = arith.addf %841, %844 : vector<8x128xf32>
    %c201 = arith.constant 201 : index
    %846 = memref.load %arg2[%c201] : memref<329xf32, #tpu.memory_space<smem>>
    %847 = vector.broadcast %846 : f32 to vector<8x128xf32>
    %848 = arith.mulf %847, %299 : vector<8x128xf32>
    %849 = arith.addf %845, %848 : vector<8x128xf32>
    %c202 = arith.constant 202 : index
    %850 = memref.load %arg2[%c202] : memref<329xf32, #tpu.memory_space<smem>>
    %851 = vector.broadcast %850 : f32 to vector<8x128xf32>
    %852 = arith.mulf %851, %327 : vector<8x128xf32>
    %853 = arith.addf %849, %852 : vector<8x128xf32>
    %c203 = arith.constant 203 : index
    %854 = memref.load %arg2[%c203] : memref<329xf32, #tpu.memory_space<smem>>
    %855 = vector.broadcast %854 : f32 to vector<8x128xf32>
    %856 = arith.mulf %855, %355 : vector<8x128xf32>
    %857 = arith.addf %853, %856 : vector<8x128xf32>
    %c204 = arith.constant 204 : index
    %858 = memref.load %arg2[%c204] : memref<329xf32, #tpu.memory_space<smem>>
    %859 = vector.broadcast %858 : f32 to vector<8x128xf32>
    %860 = arith.mulf %859, %383 : vector<8x128xf32>
    %861 = arith.addf %857, %860 : vector<8x128xf32>
    %c205 = arith.constant 205 : index
    %862 = memref.load %arg2[%c205] : memref<329xf32, #tpu.memory_space<smem>>
    %863 = vector.broadcast %862 : f32 to vector<8x128xf32>
    %864 = arith.mulf %863, %411 : vector<8x128xf32>
    %865 = arith.addf %861, %864 : vector<8x128xf32>
    %c206 = arith.constant 206 : index
    %866 = memref.load %arg2[%c206] : memref<329xf32, #tpu.memory_space<smem>>
    %867 = vector.broadcast %866 : f32 to vector<8x128xf32>
    %868 = arith.mulf %867, %439 : vector<8x128xf32>
    %869 = arith.addf %865, %868 : vector<8x128xf32>
    %c207 = arith.constant 207 : index
    %870 = memref.load %arg2[%c207] : memref<329xf32, #tpu.memory_space<smem>>
    %871 = vector.broadcast %870 : f32 to vector<8x128xf32>
    %872 = arith.mulf %871, %467 : vector<8x128xf32>
    %873 = arith.addf %869, %872 : vector<8x128xf32>
    %cst_32 = arith.constant 0.000000e+00 : f32
    %874 = vector.broadcast %cst_32 : f32 to vector<8x128xf32>
    %875 = arith.maximumf %873, %874 : vector<8x128xf32>
    %c246 = arith.constant 246 : index
    %876 = memref.load %arg2[%c246] : memref<329xf32, #tpu.memory_space<smem>>
    %877 = vector.broadcast %876 : f32 to vector<8x128xf32>
    %c208 = arith.constant 208 : index
    %878 = memref.load %arg2[%c208] : memref<329xf32, #tpu.memory_space<smem>>
    %879 = vector.broadcast %878 : f32 to vector<8x128xf32>
    %880 = arith.mulf %879, %47 : vector<8x128xf32>
    %881 = arith.addf %877, %880 : vector<8x128xf32>
    %c209 = arith.constant 209 : index
    %882 = memref.load %arg2[%c209] : memref<329xf32, #tpu.memory_space<smem>>
    %883 = vector.broadcast %882 : f32 to vector<8x128xf32>
    %884 = arith.mulf %883, %75 : vector<8x128xf32>
    %885 = arith.addf %881, %884 : vector<8x128xf32>
    %c210 = arith.constant 210 : index
    %886 = memref.load %arg2[%c210] : memref<329xf32, #tpu.memory_space<smem>>
    %887 = vector.broadcast %886 : f32 to vector<8x128xf32>
    %888 = arith.mulf %887, %103 : vector<8x128xf32>
    %889 = arith.addf %885, %888 : vector<8x128xf32>
    %c211 = arith.constant 211 : index
    %890 = memref.load %arg2[%c211] : memref<329xf32, #tpu.memory_space<smem>>
    %891 = vector.broadcast %890 : f32 to vector<8x128xf32>
    %892 = arith.mulf %891, %131 : vector<8x128xf32>
    %893 = arith.addf %889, %892 : vector<8x128xf32>
    %c212 = arith.constant 212 : index
    %894 = memref.load %arg2[%c212] : memref<329xf32, #tpu.memory_space<smem>>
    %895 = vector.broadcast %894 : f32 to vector<8x128xf32>
    %896 = arith.mulf %895, %159 : vector<8x128xf32>
    %897 = arith.addf %893, %896 : vector<8x128xf32>
    %c213 = arith.constant 213 : index
    %898 = memref.load %arg2[%c213] : memref<329xf32, #tpu.memory_space<smem>>
    %899 = vector.broadcast %898 : f32 to vector<8x128xf32>
    %900 = arith.mulf %899, %187 : vector<8x128xf32>
    %901 = arith.addf %897, %900 : vector<8x128xf32>
    %c214 = arith.constant 214 : index
    %902 = memref.load %arg2[%c214] : memref<329xf32, #tpu.memory_space<smem>>
    %903 = vector.broadcast %902 : f32 to vector<8x128xf32>
    %904 = arith.mulf %903, %215 : vector<8x128xf32>
    %905 = arith.addf %901, %904 : vector<8x128xf32>
    %c215 = arith.constant 215 : index
    %906 = memref.load %arg2[%c215] : memref<329xf32, #tpu.memory_space<smem>>
    %907 = vector.broadcast %906 : f32 to vector<8x128xf32>
    %908 = arith.mulf %907, %243 : vector<8x128xf32>
    %909 = arith.addf %905, %908 : vector<8x128xf32>
    %c216 = arith.constant 216 : index
    %910 = memref.load %arg2[%c216] : memref<329xf32, #tpu.memory_space<smem>>
    %911 = vector.broadcast %910 : f32 to vector<8x128xf32>
    %912 = arith.mulf %911, %271 : vector<8x128xf32>
    %913 = arith.addf %909, %912 : vector<8x128xf32>
    %c217 = arith.constant 217 : index
    %914 = memref.load %arg2[%c217] : memref<329xf32, #tpu.memory_space<smem>>
    %915 = vector.broadcast %914 : f32 to vector<8x128xf32>
    %916 = arith.mulf %915, %299 : vector<8x128xf32>
    %917 = arith.addf %913, %916 : vector<8x128xf32>
    %c218 = arith.constant 218 : index
    %918 = memref.load %arg2[%c218] : memref<329xf32, #tpu.memory_space<smem>>
    %919 = vector.broadcast %918 : f32 to vector<8x128xf32>
    %920 = arith.mulf %919, %327 : vector<8x128xf32>
    %921 = arith.addf %917, %920 : vector<8x128xf32>
    %c219 = arith.constant 219 : index
    %922 = memref.load %arg2[%c219] : memref<329xf32, #tpu.memory_space<smem>>
    %923 = vector.broadcast %922 : f32 to vector<8x128xf32>
    %924 = arith.mulf %923, %355 : vector<8x128xf32>
    %925 = arith.addf %921, %924 : vector<8x128xf32>
    %c220 = arith.constant 220 : index
    %926 = memref.load %arg2[%c220] : memref<329xf32, #tpu.memory_space<smem>>
    %927 = vector.broadcast %926 : f32 to vector<8x128xf32>
    %928 = arith.mulf %927, %383 : vector<8x128xf32>
    %929 = arith.addf %925, %928 : vector<8x128xf32>
    %c221 = arith.constant 221 : index
    %930 = memref.load %arg2[%c221] : memref<329xf32, #tpu.memory_space<smem>>
    %931 = vector.broadcast %930 : f32 to vector<8x128xf32>
    %932 = arith.mulf %931, %411 : vector<8x128xf32>
    %933 = arith.addf %929, %932 : vector<8x128xf32>
    %c222 = arith.constant 222 : index
    %934 = memref.load %arg2[%c222] : memref<329xf32, #tpu.memory_space<smem>>
    %935 = vector.broadcast %934 : f32 to vector<8x128xf32>
    %936 = arith.mulf %935, %439 : vector<8x128xf32>
    %937 = arith.addf %933, %936 : vector<8x128xf32>
    %c223 = arith.constant 223 : index
    %938 = memref.load %arg2[%c223] : memref<329xf32, #tpu.memory_space<smem>>
    %939 = vector.broadcast %938 : f32 to vector<8x128xf32>
    %940 = arith.mulf %939, %467 : vector<8x128xf32>
    %941 = arith.addf %937, %940 : vector<8x128xf32>
    %cst_33 = arith.constant 0.000000e+00 : f32
    %942 = vector.broadcast %cst_33 : f32 to vector<8x128xf32>
    %943 = arith.maximumf %941, %942 : vector<8x128xf32>
    %c247 = arith.constant 247 : index
    %944 = memref.load %arg2[%c247] : memref<329xf32, #tpu.memory_space<smem>>
    %945 = vector.broadcast %944 : f32 to vector<8x128xf32>
    %c224 = arith.constant 224 : index
    %946 = memref.load %arg2[%c224] : memref<329xf32, #tpu.memory_space<smem>>
    %947 = vector.broadcast %946 : f32 to vector<8x128xf32>
    %948 = arith.mulf %947, %47 : vector<8x128xf32>
    %949 = arith.addf %945, %948 : vector<8x128xf32>
    %c225 = arith.constant 225 : index
    %950 = memref.load %arg2[%c225] : memref<329xf32, #tpu.memory_space<smem>>
    %951 = vector.broadcast %950 : f32 to vector<8x128xf32>
    %952 = arith.mulf %951, %75 : vector<8x128xf32>
    %953 = arith.addf %949, %952 : vector<8x128xf32>
    %c226 = arith.constant 226 : index
    %954 = memref.load %arg2[%c226] : memref<329xf32, #tpu.memory_space<smem>>
    %955 = vector.broadcast %954 : f32 to vector<8x128xf32>
    %956 = arith.mulf %955, %103 : vector<8x128xf32>
    %957 = arith.addf %953, %956 : vector<8x128xf32>
    %c227 = arith.constant 227 : index
    %958 = memref.load %arg2[%c227] : memref<329xf32, #tpu.memory_space<smem>>
    %959 = vector.broadcast %958 : f32 to vector<8x128xf32>
    %960 = arith.mulf %959, %131 : vector<8x128xf32>
    %961 = arith.addf %957, %960 : vector<8x128xf32>
    %c228 = arith.constant 228 : index
    %962 = memref.load %arg2[%c228] : memref<329xf32, #tpu.memory_space<smem>>
    %963 = vector.broadcast %962 : f32 to vector<8x128xf32>
    %964 = arith.mulf %963, %159 : vector<8x128xf32>
    %965 = arith.addf %961, %964 : vector<8x128xf32>
    %c229 = arith.constant 229 : index
    %966 = memref.load %arg2[%c229] : memref<329xf32, #tpu.memory_space<smem>>
    %967 = vector.broadcast %966 : f32 to vector<8x128xf32>
    %968 = arith.mulf %967, %187 : vector<8x128xf32>
    %969 = arith.addf %965, %968 : vector<8x128xf32>
    %c230 = arith.constant 230 : index
    %970 = memref.load %arg2[%c230] : memref<329xf32, #tpu.memory_space<smem>>
    %971 = vector.broadcast %970 : f32 to vector<8x128xf32>
    %972 = arith.mulf %971, %215 : vector<8x128xf32>
    %973 = arith.addf %969, %972 : vector<8x128xf32>
    %c231 = arith.constant 231 : index
    %974 = memref.load %arg2[%c231] : memref<329xf32, #tpu.memory_space<smem>>
    %975 = vector.broadcast %974 : f32 to vector<8x128xf32>
    %976 = arith.mulf %975, %243 : vector<8x128xf32>
    %977 = arith.addf %973, %976 : vector<8x128xf32>
    %c232 = arith.constant 232 : index
    %978 = memref.load %arg2[%c232] : memref<329xf32, #tpu.memory_space<smem>>
    %979 = vector.broadcast %978 : f32 to vector<8x128xf32>
    %980 = arith.mulf %979, %271 : vector<8x128xf32>
    %981 = arith.addf %977, %980 : vector<8x128xf32>
    %c233 = arith.constant 233 : index
    %982 = memref.load %arg2[%c233] : memref<329xf32, #tpu.memory_space<smem>>
    %983 = vector.broadcast %982 : f32 to vector<8x128xf32>
    %984 = arith.mulf %983, %299 : vector<8x128xf32>
    %985 = arith.addf %981, %984 : vector<8x128xf32>
    %c234 = arith.constant 234 : index
    %986 = memref.load %arg2[%c234] : memref<329xf32, #tpu.memory_space<smem>>
    %987 = vector.broadcast %986 : f32 to vector<8x128xf32>
    %988 = arith.mulf %987, %327 : vector<8x128xf32>
    %989 = arith.addf %985, %988 : vector<8x128xf32>
    %c235 = arith.constant 235 : index
    %990 = memref.load %arg2[%c235] : memref<329xf32, #tpu.memory_space<smem>>
    %991 = vector.broadcast %990 : f32 to vector<8x128xf32>
    %992 = arith.mulf %991, %355 : vector<8x128xf32>
    %993 = arith.addf %989, %992 : vector<8x128xf32>
    %c236 = arith.constant 236 : index
    %994 = memref.load %arg2[%c236] : memref<329xf32, #tpu.memory_space<smem>>
    %995 = vector.broadcast %994 : f32 to vector<8x128xf32>
    %996 = arith.mulf %995, %383 : vector<8x128xf32>
    %997 = arith.addf %993, %996 : vector<8x128xf32>
    %c237 = arith.constant 237 : index
    %998 = memref.load %arg2[%c237] : memref<329xf32, #tpu.memory_space<smem>>
    %999 = vector.broadcast %998 : f32 to vector<8x128xf32>
    %1000 = arith.mulf %999, %411 : vector<8x128xf32>
    %1001 = arith.addf %997, %1000 : vector<8x128xf32>
    %c238 = arith.constant 238 : index
    %1002 = memref.load %arg2[%c238] : memref<329xf32, #tpu.memory_space<smem>>
    %1003 = vector.broadcast %1002 : f32 to vector<8x128xf32>
    %1004 = arith.mulf %1003, %439 : vector<8x128xf32>
    %1005 = arith.addf %1001, %1004 : vector<8x128xf32>
    %c239 = arith.constant 239 : index
    %1006 = memref.load %arg2[%c239] : memref<329xf32, #tpu.memory_space<smem>>
    %1007 = vector.broadcast %1006 : f32 to vector<8x128xf32>
    %1008 = arith.mulf %1007, %467 : vector<8x128xf32>
    %1009 = arith.addf %1005, %1008 : vector<8x128xf32>
    %cst_34 = arith.constant 0.000000e+00 : f32
    %1010 = vector.broadcast %cst_34 : f32 to vector<8x128xf32>
    %1011 = arith.maximumf %1009, %1010 : vector<8x128xf32>
    %c312 = arith.constant 312 : index
    %1012 = memref.load %arg2[%c312] : memref<329xf32, #tpu.memory_space<smem>>
    %1013 = vector.broadcast %1012 : f32 to vector<8x128xf32>
    %c248 = arith.constant 248 : index
    %1014 = memref.load %arg2[%c248] : memref<329xf32, #tpu.memory_space<smem>>
    %1015 = vector.broadcast %1014 : f32 to vector<8x128xf32>
    %1016 = arith.mulf %1015, %535 : vector<8x128xf32>
    %1017 = arith.addf %1013, %1016 : vector<8x128xf32>
    %c249 = arith.constant 249 : index
    %1018 = memref.load %arg2[%c249] : memref<329xf32, #tpu.memory_space<smem>>
    %1019 = vector.broadcast %1018 : f32 to vector<8x128xf32>
    %1020 = arith.mulf %1019, %603 : vector<8x128xf32>
    %1021 = arith.addf %1017, %1020 : vector<8x128xf32>
    %c250 = arith.constant 250 : index
    %1022 = memref.load %arg2[%c250] : memref<329xf32, #tpu.memory_space<smem>>
    %1023 = vector.broadcast %1022 : f32 to vector<8x128xf32>
    %1024 = arith.mulf %1023, %671 : vector<8x128xf32>
    %1025 = arith.addf %1021, %1024 : vector<8x128xf32>
    %c251 = arith.constant 251 : index
    %1026 = memref.load %arg2[%c251] : memref<329xf32, #tpu.memory_space<smem>>
    %1027 = vector.broadcast %1026 : f32 to vector<8x128xf32>
    %1028 = arith.mulf %1027, %739 : vector<8x128xf32>
    %1029 = arith.addf %1025, %1028 : vector<8x128xf32>
    %c252 = arith.constant 252 : index
    %1030 = memref.load %arg2[%c252] : memref<329xf32, #tpu.memory_space<smem>>
    %1031 = vector.broadcast %1030 : f32 to vector<8x128xf32>
    %1032 = arith.mulf %1031, %807 : vector<8x128xf32>
    %1033 = arith.addf %1029, %1032 : vector<8x128xf32>
    %c253 = arith.constant 253 : index
    %1034 = memref.load %arg2[%c253] : memref<329xf32, #tpu.memory_space<smem>>
    %1035 = vector.broadcast %1034 : f32 to vector<8x128xf32>
    %1036 = arith.mulf %1035, %875 : vector<8x128xf32>
    %1037 = arith.addf %1033, %1036 : vector<8x128xf32>
    %c254 = arith.constant 254 : index
    %1038 = memref.load %arg2[%c254] : memref<329xf32, #tpu.memory_space<smem>>
    %1039 = vector.broadcast %1038 : f32 to vector<8x128xf32>
    %1040 = arith.mulf %1039, %943 : vector<8x128xf32>
    %1041 = arith.addf %1037, %1040 : vector<8x128xf32>
    %c255 = arith.constant 255 : index
    %1042 = memref.load %arg2[%c255] : memref<329xf32, #tpu.memory_space<smem>>
    %1043 = vector.broadcast %1042 : f32 to vector<8x128xf32>
    %1044 = arith.mulf %1043, %1011 : vector<8x128xf32>
    %1045 = arith.addf %1041, %1044 : vector<8x128xf32>
    %cst_35 = arith.constant 0.000000e+00 : f32
    %1046 = vector.broadcast %cst_35 : f32 to vector<8x128xf32>
    %1047 = arith.maximumf %1045, %1046 : vector<8x128xf32>
    %c313 = arith.constant 313 : index
    %1048 = memref.load %arg2[%c313] : memref<329xf32, #tpu.memory_space<smem>>
    %1049 = vector.broadcast %1048 : f32 to vector<8x128xf32>
    %c256 = arith.constant 256 : index
    %1050 = memref.load %arg2[%c256] : memref<329xf32, #tpu.memory_space<smem>>
    %1051 = vector.broadcast %1050 : f32 to vector<8x128xf32>
    %1052 = arith.mulf %1051, %535 : vector<8x128xf32>
    %1053 = arith.addf %1049, %1052 : vector<8x128xf32>
    %c257 = arith.constant 257 : index
    %1054 = memref.load %arg2[%c257] : memref<329xf32, #tpu.memory_space<smem>>
    %1055 = vector.broadcast %1054 : f32 to vector<8x128xf32>
    %1056 = arith.mulf %1055, %603 : vector<8x128xf32>
    %1057 = arith.addf %1053, %1056 : vector<8x128xf32>
    %c258 = arith.constant 258 : index
    %1058 = memref.load %arg2[%c258] : memref<329xf32, #tpu.memory_space<smem>>
    %1059 = vector.broadcast %1058 : f32 to vector<8x128xf32>
    %1060 = arith.mulf %1059, %671 : vector<8x128xf32>
    %1061 = arith.addf %1057, %1060 : vector<8x128xf32>
    %c259 = arith.constant 259 : index
    %1062 = memref.load %arg2[%c259] : memref<329xf32, #tpu.memory_space<smem>>
    %1063 = vector.broadcast %1062 : f32 to vector<8x128xf32>
    %1064 = arith.mulf %1063, %739 : vector<8x128xf32>
    %1065 = arith.addf %1061, %1064 : vector<8x128xf32>
    %c260 = arith.constant 260 : index
    %1066 = memref.load %arg2[%c260] : memref<329xf32, #tpu.memory_space<smem>>
    %1067 = vector.broadcast %1066 : f32 to vector<8x128xf32>
    %1068 = arith.mulf %1067, %807 : vector<8x128xf32>
    %1069 = arith.addf %1065, %1068 : vector<8x128xf32>
    %c261 = arith.constant 261 : index
    %1070 = memref.load %arg2[%c261] : memref<329xf32, #tpu.memory_space<smem>>
    %1071 = vector.broadcast %1070 : f32 to vector<8x128xf32>
    %1072 = arith.mulf %1071, %875 : vector<8x128xf32>
    %1073 = arith.addf %1069, %1072 : vector<8x128xf32>
    %c262 = arith.constant 262 : index
    %1074 = memref.load %arg2[%c262] : memref<329xf32, #tpu.memory_space<smem>>
    %1075 = vector.broadcast %1074 : f32 to vector<8x128xf32>
    %1076 = arith.mulf %1075, %943 : vector<8x128xf32>
    %1077 = arith.addf %1073, %1076 : vector<8x128xf32>
    %c263 = arith.constant 263 : index
    %1078 = memref.load %arg2[%c263] : memref<329xf32, #tpu.memory_space<smem>>
    %1079 = vector.broadcast %1078 : f32 to vector<8x128xf32>
    %1080 = arith.mulf %1079, %1011 : vector<8x128xf32>
    %1081 = arith.addf %1077, %1080 : vector<8x128xf32>
    %cst_36 = arith.constant 0.000000e+00 : f32
    %1082 = vector.broadcast %cst_36 : f32 to vector<8x128xf32>
    %1083 = arith.maximumf %1081, %1082 : vector<8x128xf32>
    %c314 = arith.constant 314 : index
    %1084 = memref.load %arg2[%c314] : memref<329xf32, #tpu.memory_space<smem>>
    %1085 = vector.broadcast %1084 : f32 to vector<8x128xf32>
    %c264 = arith.constant 264 : index
    %1086 = memref.load %arg2[%c264] : memref<329xf32, #tpu.memory_space<smem>>
    %1087 = vector.broadcast %1086 : f32 to vector<8x128xf32>
    %1088 = arith.mulf %1087, %535 : vector<8x128xf32>
    %1089 = arith.addf %1085, %1088 : vector<8x128xf32>
    %c265 = arith.constant 265 : index
    %1090 = memref.load %arg2[%c265] : memref<329xf32, #tpu.memory_space<smem>>
    %1091 = vector.broadcast %1090 : f32 to vector<8x128xf32>
    %1092 = arith.mulf %1091, %603 : vector<8x128xf32>
    %1093 = arith.addf %1089, %1092 : vector<8x128xf32>
    %c266 = arith.constant 266 : index
    %1094 = memref.load %arg2[%c266] : memref<329xf32, #tpu.memory_space<smem>>
    %1095 = vector.broadcast %1094 : f32 to vector<8x128xf32>
    %1096 = arith.mulf %1095, %671 : vector<8x128xf32>
    %1097 = arith.addf %1093, %1096 : vector<8x128xf32>
    %c267 = arith.constant 267 : index
    %1098 = memref.load %arg2[%c267] : memref<329xf32, #tpu.memory_space<smem>>
    %1099 = vector.broadcast %1098 : f32 to vector<8x128xf32>
    %1100 = arith.mulf %1099, %739 : vector<8x128xf32>
    %1101 = arith.addf %1097, %1100 : vector<8x128xf32>
    %c268 = arith.constant 268 : index
    %1102 = memref.load %arg2[%c268] : memref<329xf32, #tpu.memory_space<smem>>
    %1103 = vector.broadcast %1102 : f32 to vector<8x128xf32>
    %1104 = arith.mulf %1103, %807 : vector<8x128xf32>
    %1105 = arith.addf %1101, %1104 : vector<8x128xf32>
    %c269 = arith.constant 269 : index
    %1106 = memref.load %arg2[%c269] : memref<329xf32, #tpu.memory_space<smem>>
    %1107 = vector.broadcast %1106 : f32 to vector<8x128xf32>
    %1108 = arith.mulf %1107, %875 : vector<8x128xf32>
    %1109 = arith.addf %1105, %1108 : vector<8x128xf32>
    %c270 = arith.constant 270 : index
    %1110 = memref.load %arg2[%c270] : memref<329xf32, #tpu.memory_space<smem>>
    %1111 = vector.broadcast %1110 : f32 to vector<8x128xf32>
    %1112 = arith.mulf %1111, %943 : vector<8x128xf32>
    %1113 = arith.addf %1109, %1112 : vector<8x128xf32>
    %c271 = arith.constant 271 : index
    %1114 = memref.load %arg2[%c271] : memref<329xf32, #tpu.memory_space<smem>>
    %1115 = vector.broadcast %1114 : f32 to vector<8x128xf32>
    %1116 = arith.mulf %1115, %1011 : vector<8x128xf32>
    %1117 = arith.addf %1113, %1116 : vector<8x128xf32>
    %cst_37 = arith.constant 0.000000e+00 : f32
    %1118 = vector.broadcast %cst_37 : f32 to vector<8x128xf32>
    %1119 = arith.maximumf %1117, %1118 : vector<8x128xf32>
    %c315 = arith.constant 315 : index
    %1120 = memref.load %arg2[%c315] : memref<329xf32, #tpu.memory_space<smem>>
    %1121 = vector.broadcast %1120 : f32 to vector<8x128xf32>
    %c272 = arith.constant 272 : index
    %1122 = memref.load %arg2[%c272] : memref<329xf32, #tpu.memory_space<smem>>
    %1123 = vector.broadcast %1122 : f32 to vector<8x128xf32>
    %1124 = arith.mulf %1123, %535 : vector<8x128xf32>
    %1125 = arith.addf %1121, %1124 : vector<8x128xf32>
    %c273 = arith.constant 273 : index
    %1126 = memref.load %arg2[%c273] : memref<329xf32, #tpu.memory_space<smem>>
    %1127 = vector.broadcast %1126 : f32 to vector<8x128xf32>
    %1128 = arith.mulf %1127, %603 : vector<8x128xf32>
    %1129 = arith.addf %1125, %1128 : vector<8x128xf32>
    %c274 = arith.constant 274 : index
    %1130 = memref.load %arg2[%c274] : memref<329xf32, #tpu.memory_space<smem>>
    %1131 = vector.broadcast %1130 : f32 to vector<8x128xf32>
    %1132 = arith.mulf %1131, %671 : vector<8x128xf32>
    %1133 = arith.addf %1129, %1132 : vector<8x128xf32>
    %c275 = arith.constant 275 : index
    %1134 = memref.load %arg2[%c275] : memref<329xf32, #tpu.memory_space<smem>>
    %1135 = vector.broadcast %1134 : f32 to vector<8x128xf32>
    %1136 = arith.mulf %1135, %739 : vector<8x128xf32>
    %1137 = arith.addf %1133, %1136 : vector<8x128xf32>
    %c276 = arith.constant 276 : index
    %1138 = memref.load %arg2[%c276] : memref<329xf32, #tpu.memory_space<smem>>
    %1139 = vector.broadcast %1138 : f32 to vector<8x128xf32>
    %1140 = arith.mulf %1139, %807 : vector<8x128xf32>
    %1141 = arith.addf %1137, %1140 : vector<8x128xf32>
    %c277 = arith.constant 277 : index
    %1142 = memref.load %arg2[%c277] : memref<329xf32, #tpu.memory_space<smem>>
    %1143 = vector.broadcast %1142 : f32 to vector<8x128xf32>
    %1144 = arith.mulf %1143, %875 : vector<8x128xf32>
    %1145 = arith.addf %1141, %1144 : vector<8x128xf32>
    %c278 = arith.constant 278 : index
    %1146 = memref.load %arg2[%c278] : memref<329xf32, #tpu.memory_space<smem>>
    %1147 = vector.broadcast %1146 : f32 to vector<8x128xf32>
    %1148 = arith.mulf %1147, %943 : vector<8x128xf32>
    %1149 = arith.addf %1145, %1148 : vector<8x128xf32>
    %c279 = arith.constant 279 : index
    %1150 = memref.load %arg2[%c279] : memref<329xf32, #tpu.memory_space<smem>>
    %1151 = vector.broadcast %1150 : f32 to vector<8x128xf32>
    %1152 = arith.mulf %1151, %1011 : vector<8x128xf32>
    %1153 = arith.addf %1149, %1152 : vector<8x128xf32>
    %cst_38 = arith.constant 0.000000e+00 : f32
    %1154 = vector.broadcast %cst_38 : f32 to vector<8x128xf32>
    %1155 = arith.maximumf %1153, %1154 : vector<8x128xf32>
    %c316 = arith.constant 316 : index
    %1156 = memref.load %arg2[%c316] : memref<329xf32, #tpu.memory_space<smem>>
    %1157 = vector.broadcast %1156 : f32 to vector<8x128xf32>
    %c280 = arith.constant 280 : index
    %1158 = memref.load %arg2[%c280] : memref<329xf32, #tpu.memory_space<smem>>
    %1159 = vector.broadcast %1158 : f32 to vector<8x128xf32>
    %1160 = arith.mulf %1159, %535 : vector<8x128xf32>
    %1161 = arith.addf %1157, %1160 : vector<8x128xf32>
    %c281 = arith.constant 281 : index
    %1162 = memref.load %arg2[%c281] : memref<329xf32, #tpu.memory_space<smem>>
    %1163 = vector.broadcast %1162 : f32 to vector<8x128xf32>
    %1164 = arith.mulf %1163, %603 : vector<8x128xf32>
    %1165 = arith.addf %1161, %1164 : vector<8x128xf32>
    %c282 = arith.constant 282 : index
    %1166 = memref.load %arg2[%c282] : memref<329xf32, #tpu.memory_space<smem>>
    %1167 = vector.broadcast %1166 : f32 to vector<8x128xf32>
    %1168 = arith.mulf %1167, %671 : vector<8x128xf32>
    %1169 = arith.addf %1165, %1168 : vector<8x128xf32>
    %c283 = arith.constant 283 : index
    %1170 = memref.load %arg2[%c283] : memref<329xf32, #tpu.memory_space<smem>>
    %1171 = vector.broadcast %1170 : f32 to vector<8x128xf32>
    %1172 = arith.mulf %1171, %739 : vector<8x128xf32>
    %1173 = arith.addf %1169, %1172 : vector<8x128xf32>
    %c284 = arith.constant 284 : index
    %1174 = memref.load %arg2[%c284] : memref<329xf32, #tpu.memory_space<smem>>
    %1175 = vector.broadcast %1174 : f32 to vector<8x128xf32>
    %1176 = arith.mulf %1175, %807 : vector<8x128xf32>
    %1177 = arith.addf %1173, %1176 : vector<8x128xf32>
    %c285 = arith.constant 285 : index
    %1178 = memref.load %arg2[%c285] : memref<329xf32, #tpu.memory_space<smem>>
    %1179 = vector.broadcast %1178 : f32 to vector<8x128xf32>
    %1180 = arith.mulf %1179, %875 : vector<8x128xf32>
    %1181 = arith.addf %1177, %1180 : vector<8x128xf32>
    %c286 = arith.constant 286 : index
    %1182 = memref.load %arg2[%c286] : memref<329xf32, #tpu.memory_space<smem>>
    %1183 = vector.broadcast %1182 : f32 to vector<8x128xf32>
    %1184 = arith.mulf %1183, %943 : vector<8x128xf32>
    %1185 = arith.addf %1181, %1184 : vector<8x128xf32>
    %c287 = arith.constant 287 : index
    %1186 = memref.load %arg2[%c287] : memref<329xf32, #tpu.memory_space<smem>>
    %1187 = vector.broadcast %1186 : f32 to vector<8x128xf32>
    %1188 = arith.mulf %1187, %1011 : vector<8x128xf32>
    %1189 = arith.addf %1185, %1188 : vector<8x128xf32>
    %cst_39 = arith.constant 0.000000e+00 : f32
    %1190 = vector.broadcast %cst_39 : f32 to vector<8x128xf32>
    %1191 = arith.maximumf %1189, %1190 : vector<8x128xf32>
    %c317 = arith.constant 317 : index
    %1192 = memref.load %arg2[%c317] : memref<329xf32, #tpu.memory_space<smem>>
    %1193 = vector.broadcast %1192 : f32 to vector<8x128xf32>
    %c288 = arith.constant 288 : index
    %1194 = memref.load %arg2[%c288] : memref<329xf32, #tpu.memory_space<smem>>
    %1195 = vector.broadcast %1194 : f32 to vector<8x128xf32>
    %1196 = arith.mulf %1195, %535 : vector<8x128xf32>
    %1197 = arith.addf %1193, %1196 : vector<8x128xf32>
    %c289 = arith.constant 289 : index
    %1198 = memref.load %arg2[%c289] : memref<329xf32, #tpu.memory_space<smem>>
    %1199 = vector.broadcast %1198 : f32 to vector<8x128xf32>
    %1200 = arith.mulf %1199, %603 : vector<8x128xf32>
    %1201 = arith.addf %1197, %1200 : vector<8x128xf32>
    %c290 = arith.constant 290 : index
    %1202 = memref.load %arg2[%c290] : memref<329xf32, #tpu.memory_space<smem>>
    %1203 = vector.broadcast %1202 : f32 to vector<8x128xf32>
    %1204 = arith.mulf %1203, %671 : vector<8x128xf32>
    %1205 = arith.addf %1201, %1204 : vector<8x128xf32>
    %c291 = arith.constant 291 : index
    %1206 = memref.load %arg2[%c291] : memref<329xf32, #tpu.memory_space<smem>>
    %1207 = vector.broadcast %1206 : f32 to vector<8x128xf32>
    %1208 = arith.mulf %1207, %739 : vector<8x128xf32>
    %1209 = arith.addf %1205, %1208 : vector<8x128xf32>
    %c292 = arith.constant 292 : index
    %1210 = memref.load %arg2[%c292] : memref<329xf32, #tpu.memory_space<smem>>
    %1211 = vector.broadcast %1210 : f32 to vector<8x128xf32>
    %1212 = arith.mulf %1211, %807 : vector<8x128xf32>
    %1213 = arith.addf %1209, %1212 : vector<8x128xf32>
    %c293 = arith.constant 293 : index
    %1214 = memref.load %arg2[%c293] : memref<329xf32, #tpu.memory_space<smem>>
    %1215 = vector.broadcast %1214 : f32 to vector<8x128xf32>
    %1216 = arith.mulf %1215, %875 : vector<8x128xf32>
    %1217 = arith.addf %1213, %1216 : vector<8x128xf32>
    %c294 = arith.constant 294 : index
    %1218 = memref.load %arg2[%c294] : memref<329xf32, #tpu.memory_space<smem>>
    %1219 = vector.broadcast %1218 : f32 to vector<8x128xf32>
    %1220 = arith.mulf %1219, %943 : vector<8x128xf32>
    %1221 = arith.addf %1217, %1220 : vector<8x128xf32>
    %c295 = arith.constant 295 : index
    %1222 = memref.load %arg2[%c295] : memref<329xf32, #tpu.memory_space<smem>>
    %1223 = vector.broadcast %1222 : f32 to vector<8x128xf32>
    %1224 = arith.mulf %1223, %1011 : vector<8x128xf32>
    %1225 = arith.addf %1221, %1224 : vector<8x128xf32>
    %cst_40 = arith.constant 0.000000e+00 : f32
    %1226 = vector.broadcast %cst_40 : f32 to vector<8x128xf32>
    %1227 = arith.maximumf %1225, %1226 : vector<8x128xf32>
    %c318 = arith.constant 318 : index
    %1228 = memref.load %arg2[%c318] : memref<329xf32, #tpu.memory_space<smem>>
    %1229 = vector.broadcast %1228 : f32 to vector<8x128xf32>
    %c296 = arith.constant 296 : index
    %1230 = memref.load %arg2[%c296] : memref<329xf32, #tpu.memory_space<smem>>
    %1231 = vector.broadcast %1230 : f32 to vector<8x128xf32>
    %1232 = arith.mulf %1231, %535 : vector<8x128xf32>
    %1233 = arith.addf %1229, %1232 : vector<8x128xf32>
    %c297 = arith.constant 297 : index
    %1234 = memref.load %arg2[%c297] : memref<329xf32, #tpu.memory_space<smem>>
    %1235 = vector.broadcast %1234 : f32 to vector<8x128xf32>
    %1236 = arith.mulf %1235, %603 : vector<8x128xf32>
    %1237 = arith.addf %1233, %1236 : vector<8x128xf32>
    %c298 = arith.constant 298 : index
    %1238 = memref.load %arg2[%c298] : memref<329xf32, #tpu.memory_space<smem>>
    %1239 = vector.broadcast %1238 : f32 to vector<8x128xf32>
    %1240 = arith.mulf %1239, %671 : vector<8x128xf32>
    %1241 = arith.addf %1237, %1240 : vector<8x128xf32>
    %c299 = arith.constant 299 : index
    %1242 = memref.load %arg2[%c299] : memref<329xf32, #tpu.memory_space<smem>>
    %1243 = vector.broadcast %1242 : f32 to vector<8x128xf32>
    %1244 = arith.mulf %1243, %739 : vector<8x128xf32>
    %1245 = arith.addf %1241, %1244 : vector<8x128xf32>
    %c300 = arith.constant 300 : index
    %1246 = memref.load %arg2[%c300] : memref<329xf32, #tpu.memory_space<smem>>
    %1247 = vector.broadcast %1246 : f32 to vector<8x128xf32>
    %1248 = arith.mulf %1247, %807 : vector<8x128xf32>
    %1249 = arith.addf %1245, %1248 : vector<8x128xf32>
    %c301 = arith.constant 301 : index
    %1250 = memref.load %arg2[%c301] : memref<329xf32, #tpu.memory_space<smem>>
    %1251 = vector.broadcast %1250 : f32 to vector<8x128xf32>
    %1252 = arith.mulf %1251, %875 : vector<8x128xf32>
    %1253 = arith.addf %1249, %1252 : vector<8x128xf32>
    %c302 = arith.constant 302 : index
    %1254 = memref.load %arg2[%c302] : memref<329xf32, #tpu.memory_space<smem>>
    %1255 = vector.broadcast %1254 : f32 to vector<8x128xf32>
    %1256 = arith.mulf %1255, %943 : vector<8x128xf32>
    %1257 = arith.addf %1253, %1256 : vector<8x128xf32>
    %c303 = arith.constant 303 : index
    %1258 = memref.load %arg2[%c303] : memref<329xf32, #tpu.memory_space<smem>>
    %1259 = vector.broadcast %1258 : f32 to vector<8x128xf32>
    %1260 = arith.mulf %1259, %1011 : vector<8x128xf32>
    %1261 = arith.addf %1257, %1260 : vector<8x128xf32>
    %cst_41 = arith.constant 0.000000e+00 : f32
    %1262 = vector.broadcast %cst_41 : f32 to vector<8x128xf32>
    %1263 = arith.maximumf %1261, %1262 : vector<8x128xf32>
    %c319 = arith.constant 319 : index
    %1264 = memref.load %arg2[%c319] : memref<329xf32, #tpu.memory_space<smem>>
    %1265 = vector.broadcast %1264 : f32 to vector<8x128xf32>
    %c304 = arith.constant 304 : index
    %1266 = memref.load %arg2[%c304] : memref<329xf32, #tpu.memory_space<smem>>
    %1267 = vector.broadcast %1266 : f32 to vector<8x128xf32>
    %1268 = arith.mulf %1267, %535 : vector<8x128xf32>
    %1269 = arith.addf %1265, %1268 : vector<8x128xf32>
    %c305 = arith.constant 305 : index
    %1270 = memref.load %arg2[%c305] : memref<329xf32, #tpu.memory_space<smem>>
    %1271 = vector.broadcast %1270 : f32 to vector<8x128xf32>
    %1272 = arith.mulf %1271, %603 : vector<8x128xf32>
    %1273 = arith.addf %1269, %1272 : vector<8x128xf32>
    %c306 = arith.constant 306 : index
    %1274 = memref.load %arg2[%c306] : memref<329xf32, #tpu.memory_space<smem>>
    %1275 = vector.broadcast %1274 : f32 to vector<8x128xf32>
    %1276 = arith.mulf %1275, %671 : vector<8x128xf32>
    %1277 = arith.addf %1273, %1276 : vector<8x128xf32>
    %c307 = arith.constant 307 : index
    %1278 = memref.load %arg2[%c307] : memref<329xf32, #tpu.memory_space<smem>>
    %1279 = vector.broadcast %1278 : f32 to vector<8x128xf32>
    %1280 = arith.mulf %1279, %739 : vector<8x128xf32>
    %1281 = arith.addf %1277, %1280 : vector<8x128xf32>
    %c308 = arith.constant 308 : index
    %1282 = memref.load %arg2[%c308] : memref<329xf32, #tpu.memory_space<smem>>
    %1283 = vector.broadcast %1282 : f32 to vector<8x128xf32>
    %1284 = arith.mulf %1283, %807 : vector<8x128xf32>
    %1285 = arith.addf %1281, %1284 : vector<8x128xf32>
    %c309 = arith.constant 309 : index
    %1286 = memref.load %arg2[%c309] : memref<329xf32, #tpu.memory_space<smem>>
    %1287 = vector.broadcast %1286 : f32 to vector<8x128xf32>
    %1288 = arith.mulf %1287, %875 : vector<8x128xf32>
    %1289 = arith.addf %1285, %1288 : vector<8x128xf32>
    %c310 = arith.constant 310 : index
    %1290 = memref.load %arg2[%c310] : memref<329xf32, #tpu.memory_space<smem>>
    %1291 = vector.broadcast %1290 : f32 to vector<8x128xf32>
    %1292 = arith.mulf %1291, %943 : vector<8x128xf32>
    %1293 = arith.addf %1289, %1292 : vector<8x128xf32>
    %c311 = arith.constant 311 : index
    %1294 = memref.load %arg2[%c311] : memref<329xf32, #tpu.memory_space<smem>>
    %1295 = vector.broadcast %1294 : f32 to vector<8x128xf32>
    %1296 = arith.mulf %1295, %1011 : vector<8x128xf32>
    %1297 = arith.addf %1293, %1296 : vector<8x128xf32>
    %cst_42 = arith.constant 0.000000e+00 : f32
    %1298 = vector.broadcast %cst_42 : f32 to vector<8x128xf32>
    %1299 = arith.maximumf %1297, %1298 : vector<8x128xf32>
    %c328 = arith.constant 328 : index
    %1300 = memref.load %arg2[%c328] : memref<329xf32, #tpu.memory_space<smem>>
    %1301 = vector.broadcast %1300 : f32 to vector<8x128xf32>
    %c320 = arith.constant 320 : index
    %1302 = memref.load %arg2[%c320] : memref<329xf32, #tpu.memory_space<smem>>
    %1303 = vector.broadcast %1302 : f32 to vector<8x128xf32>
    %1304 = arith.mulf %1303, %1047 : vector<8x128xf32>
    %1305 = arith.addf %1301, %1304 : vector<8x128xf32>
    %c321 = arith.constant 321 : index
    %1306 = memref.load %arg2[%c321] : memref<329xf32, #tpu.memory_space<smem>>
    %1307 = vector.broadcast %1306 : f32 to vector<8x128xf32>
    %1308 = arith.mulf %1307, %1083 : vector<8x128xf32>
    %1309 = arith.addf %1305, %1308 : vector<8x128xf32>
    %c322 = arith.constant 322 : index
    %1310 = memref.load %arg2[%c322] : memref<329xf32, #tpu.memory_space<smem>>
    %1311 = vector.broadcast %1310 : f32 to vector<8x128xf32>
    %1312 = arith.mulf %1311, %1119 : vector<8x128xf32>
    %1313 = arith.addf %1309, %1312 : vector<8x128xf32>
    %c323 = arith.constant 323 : index
    %1314 = memref.load %arg2[%c323] : memref<329xf32, #tpu.memory_space<smem>>
    %1315 = vector.broadcast %1314 : f32 to vector<8x128xf32>
    %1316 = arith.mulf %1315, %1155 : vector<8x128xf32>
    %1317 = arith.addf %1313, %1316 : vector<8x128xf32>
    %c324 = arith.constant 324 : index
    %1318 = memref.load %arg2[%c324] : memref<329xf32, #tpu.memory_space<smem>>
    %1319 = vector.broadcast %1318 : f32 to vector<8x128xf32>
    %1320 = arith.mulf %1319, %1191 : vector<8x128xf32>
    %1321 = arith.addf %1317, %1320 : vector<8x128xf32>
    %c325 = arith.constant 325 : index
    %1322 = memref.load %arg2[%c325] : memref<329xf32, #tpu.memory_space<smem>>
    %1323 = vector.broadcast %1322 : f32 to vector<8x128xf32>
    %1324 = arith.mulf %1323, %1227 : vector<8x128xf32>
    %1325 = arith.addf %1321, %1324 : vector<8x128xf32>
    %c326 = arith.constant 326 : index
    %1326 = memref.load %arg2[%c326] : memref<329xf32, #tpu.memory_space<smem>>
    %1327 = vector.broadcast %1326 : f32 to vector<8x128xf32>
    %1328 = arith.mulf %1327, %1263 : vector<8x128xf32>
    %1329 = arith.addf %1325, %1328 : vector<8x128xf32>
    %c327 = arith.constant 327 : index
    %1330 = memref.load %arg2[%c327] : memref<329xf32, #tpu.memory_space<smem>>
    %1331 = vector.broadcast %1330 : f32 to vector<8x128xf32>
    %1332 = arith.mulf %1331, %1299 : vector<8x128xf32>
    %1333 = arith.addf %1329, %1332 : vector<8x128xf32>
    %1334 = math.exp %1333 : vector<8x128xf32>
    %cst_43 = arith.constant 1.000000e+00 : f32
    %1335 = vector.broadcast %cst_43 : f32 to vector<8x128xf32>
    %1336 = arith.addf %1335, %1334 : vector<8x128xf32>
    %cst_44 = arith.constant 1.000000e+00 : f32
    %1337 = vector.broadcast %cst_44 : f32 to vector<8x128xf32>
    %1338 = arith.divf %1337, %1336 : vector<8x128xf32>
    %1339 = arith.index_cast %1 : i32 to index
    %c0_45 = arith.constant 0 : index
    %1340 = vector.load %arg3[%1339, %c0_45] : memref<8x128xf32, #tpu.memory_space<vmem>>, vector<8x128xf32>
    tpu.vector_store %arg3[%1339, %c0_45], %1338 {strides = array<i32>} : memref<8x128xf32, #tpu.memory_space<vmem>>, vector<8x128xf32>,
    %c1_i32 = arith.constant 1 : i32
    return
  }
  func.func @transform_0(%arg0: i32) -> (i32, i32, i32) {
    %c0_i32 = arith.constant 0 : i32
    %c0_i32_0 = arith.constant 0 : i32
    %c0_i32_1 = arith.constant 0 : i32
    return %c0_i32, %arg0, %c0_i32_0 : i32, i32, i32
  }
  func.func @transform_1(%arg0: i32) -> i32 {
    %c0_i32 = arith.constant 0 : i32
    %c0_i32_0 = arith.constant 0 : i32
    return %c0_i32 : i32
  }
  func.func @transform_2(%arg0: i32) -> (i32, i32) {
    %c0_i32 = arith.constant 0 : i32
    %c0_i32_0 = arith.constant 0 : i32
    return %arg0, %c0_i32 : i32, i32
  }
}

</mosaic_0001>

<llo_original>
// kernel: eorp_forward.1
$region0: #{eorp_forward.1}
  #allocation0 [shape = 'u32[]', space=smem, size = 0x4, offset = 0x4, fixed_abs, tag = 'smem constant byte address 0x4 - core index']
  #allocation1 [shape = 'u32[144,128]{1,0:T(1,128)}', space=vmem, size = 0x12000, scoped, tag = 'internal scratch']
  %s0 = inlined_call_operand.vmem [shape: f32[6,8,128], index: 0, kind: input, shape index: {}]
  %s1 = inlined_call_operand.vmem [shape: f32[329], index: 1, kind: input, shape index: {}]
  %s2 = inlined_call_operand.vmem [shape: f32[8,128], index: 2, kind: output, shape index: {}]
  %s3 = sld [smem:[#allocation0]]
  $region22: #{eorp_forward.1} parent=0
    _
  %s5 = ssub.s32 1, %s3
  %s6 = scalar_select 0, %s5, %s3
  $region1: #{eorp_forward.1} parent=0
    #allocation2 [shape = 'u8[1536]{0}', space=smem, size = 0x600, scoped, tag = 'input window, operand 1, single buffered']
    #allocation3 [shape = 's32[1]{0}', space=sflag, size = 0x4, scoped, tag = 'scoped memory for eorp_forward.1']
    %7 = vsyncpa [#allocation3], 0
    // Predicated region
    $region2: #{eorp_forward.1} parent=1 // pred_check
      _
    $region3: #{eorp_forward.1} parent=1 // pred_check_branch
      %9 = sbr.rel (0) target = $region5
    $region4: #{eorp_forward.1} parent=1 // pred_region
      _
    $region5: #{eorp_forward.1} parent=1 // pred_fallthru
      _
    // Predicated region
    $region6: #{eorp_forward.1} parent=1 // pred_check
      _
    $region7: #{eorp_forward.1} parent=1 // pred_check_branch
      %11 = sbr.rel (0) target = $region9
    $region8: #{eorp_forward.1} parent=1 // pred_region
      %s13 = ssub.s32 48, 48
      %14 = vsyncadd [#allocation3], %s13
      %s16 = sshll.u32 %s1, 4
      %s17 = int_to_ptr.vmem [resolvable:$true] %s16
      %19 = dma.vmem_to_smem %s17, 48, [#allocation2], [#allocation3]
    $region9: #{eorp_forward.1} parent=1 // pred_fallthru
      _
    // Predicated region
    $region10: #{eorp_forward.1} parent=1 // pred_check
      _
    $region11: #{eorp_forward.1} parent=1 // pred_check_branch
      %21 = sbr.rel (0) target = $region13
    $region12: #{eorp_forward.1} parent=1 // pred_region
      %22 = dma.done [#allocation3], 48
    $region13: #{eorp_forward.1} parent=1 // pred_fallthru
      _
    %23 = sfence
    %v24 = vld [vmem:[%s0] sm:$0xff]
    %s25 = sadd.s32 0, 8
    %s26 = scalar_lea.vmem %s0, %s25
    %v27 = vld [vmem:[%s26] sm:$0xff]
    %s28 = sadd.s32 0, 16
    %s29 = scalar_lea.vmem %s0, %s28
    %v30 = vld [vmem:[%s29] sm:$0xff]
    %s31 = sadd.s32 0, 24
    %s32 = scalar_lea.vmem %s0, %s31
    %v33 = vld [vmem:[%s32] sm:$0xff]
    %s34 = sadd.s32 0, 32
    %s35 = scalar_lea.vmem %s0, %s34
    %v36 = vld [vmem:[%s35] sm:$0xff]
    %s37 = sadd.s32 0, 40
    %s38 = scalar_lea.vmem %s0, %s37
    %v39 = vld [vmem:[%s38] sm:$0xff]
    %s40 = sld [smem:[#allocation2 + $0x60]]
    %v41 = vstv %s40
    %s42 = sld [smem:[#allocation2]]
    %v43 = vstv %s42
    %v44 = vmul.f32 %v43, %v24
    %v45 = vadd.f32 %v41, %v44
    %s46 = sld [smem:[#allocation2 + $0x1]]
    %v47 = vstv %s46
    %v48 = vmul.f32 %v47, %v27
    %v49 = vadd.f32 %v45, %v48
    %s50 = sld [smem:[#allocation2 + $0x2]]
    %v51 = vstv %s50
    %v52 = vmul.f32 %v51, %v30
    %v53 = vadd.f32 %v49, %v52
    %s54 = sld [smem:[#allocation2 + $0x3]]
    %v55 = vstv %s54
    %v56 = vmul.f32 %v55, %v33
    %v57 = vadd.f32 %v53, %v56
    %s58 = sld [smem:[#allocation2 + $0x4]]
    %v59 = vstv %s58
    %v60 = vmul.f32 %v59, %v36
    %v61 = vadd.f32 %v57, %v60
    %s62 = sld [smem:[#allocation2 + $0x5]]
    %v63 = vstv %s62
    %v64 = vmul.f32 %v63, %v39
    %v65 = vadd.f32 %v61, %v64
    %v66 = vmax.f32 %v65, 0.0
    %s67 = sld [smem:[#allocation2 + $0x61]]
    %v68 = vstv %s67
    %s69 = sld [smem:[#allocation2 + $0x6]]
    %v70 = vstv %s69
    %v71 = vmul.f32 %v70, %v24
    %v72 = vadd.f32 %v68, %v71
    %s73 = sld [smem:[#allocation2 + $0x7]]
    %v74 = vstv %s73
    %v75 = vmul.f32 %v74, %v27
    %v76 = vadd.f32 %v72, %v75
    %s77 = sld [smem:[#allocation2 + $0x8]]
    %v78 = vstv %s77
    %v79 = vmul.f32 %v78, %v30
    %v80 = vadd.f32 %v76, %v79
    %s81 = sld [smem:[#allocation2 + $0x9]]
    %v82 = vstv %s81
    %v83 = vmul.f32 %v82, %v33
    %v84 = vadd.f32 %v80, %v83
    %s85 = sld [smem:[#allocation2 + $0xa]]
    %v86 = vstv %s85
    %v87 = vmul.f32 %v86, %v36
    %v88 = vadd.f32 %v84, %v87
    %s89 = sld [smem:[#allocation2 + $0xb]]
    %v90 = vstv %s89
    %v91 = vmul.f32 %v90, %v39
    %v92 = vadd.f32 %v88, %v91
    %v93 = vmax.f32 %v92, 0.0
    %s94 = sld [smem:[#allocation2 + $0x62]]
    %v95 = vstv %s94
    %s96 = sld [smem:[#allocation2 + $0xc]]
    %v97 = vstv %s96
    %v98 = vmul.f32 %v97, %v24
    %v99 = vadd.f32 %v95, %v98
    %s100 = sld [smem:[#allocation2 + $0xd]]
    %v101 = vstv %s100
    %v102 = vmul.f32 %v101, %v27
    %v103 = vadd.f32 %v99, %v102
    %s104 = sld [smem:[#allocation2 + $0xe]]
    %v105 = vstv %s104
    %v106 = vmul.f32 %v105, %v30
    %v107 = vadd.f32 %v103, %v106
    %s108 = sld [smem:[#allocation2 + $0xf]]
    %v109 = vstv %s108
    %v110 = vmul.f32 %v109, %v33
    %v111 = vadd.f32 %v107, %v110
    %s112 = sld [smem:[#allocation2 + $0x10]]
    %v113 = vstv %s112
    %v114 = vmul.f32 %v113, %v36
    %v115 = vadd.f32 %v111, %v114
    %s116 = sld [smem:[#allocation2 + $0x11]]
    %v117 = vstv %s116
    %v118 = vmul.f32 %v117, %v39
    %v119 = vadd.f32 %v115, %v118
    %v120 = vmax.f32 %v119, 0.0
    %s121 = sld [smem:[#allocation2 + $0x63]]
    %v122 = vstv %s121
    %s123 = sld [smem:[#allocation2 + $0x12]]
    %v124 = vstv %s123
    %v125 = vmul.f32 %v124, %v24
    %v126 = vadd.f32 %v122, %v125
    %s127 = sld [smem:[#allocation2 + $0x13]]
    %v128 = vstv %s127
    %v129 = vmul.f32 %v128, %v27
    %v130 = vadd.f32 %v126, %v129
    %s131 = sld [smem:[#allocation2 + $0x14]]
    %v132 = vstv %s131
    %v133 = vmul.f32 %v132, %v30
    %v134 = vadd.f32 %v130, %v133
    %s135 = sld [smem:[#allocation2 + $0x15]]
    %v136 = vstv %s135
    %v137 = vmul.f32 %v136, %v33
    %v138 = vadd.f32 %v134, %v137
    %s139 = sld [smem:[#allocation2 + $0x16]]
    %v140 = vstv %s139
    %v141 = vmul.f32 %v140, %v36
    %v142 = vadd.f32 %v138, %v141
    %s143 = sld [smem:[#allocation2 + $0x17]]
    %v144 = vstv %s143
    %v145 = vmul.f32 %v144, %v39
    %v146 = vadd.f32 %v142, %v145
    %v147 = vmax.f32 %v146, 0.0
    %s148 = sld [smem:[#allocation2 + $0x64]]
    %v149 = vstv %s148
    %s150 = sld [smem:[#allocation2 + $0x18]]
    %v151 = vstv %s150
    %v152 = vmul.f32 %v151, %v24
    %v153 = vadd.f32 %v149, %v152
    %s154 = sld [smem:[#allocation2 + $0x19]]
    %v155 = vstv %s154
    %v156 = vmul.f32 %v155, %v27
    %v157 = vadd.f32 %v153, %v156
    %s158 = sld [smem:[#allocation2 + $0x1a]]
    %v159 = vstv %s158
    %v160 = vmul.f32 %v159, %v30
    %v161 = vadd.f32 %v157, %v160
    %s162 = sld [smem:[#allocation2 + $0x1b]]
    %v163 = vstv %s162
    %v164 = vmul.f32 %v163, %v33
    %v165 = vadd.f32 %v161, %v164
    %s166 = sld [smem:[#allocation2 + $0x1c]]
    %v167 = vstv %s166
    %v168 = vmul.f32 %v167, %v36
    %v169 = vadd.f32 %v165, %v168
    %s170 = sld [smem:[#allocation2 + $0x1d]]
    %v171 = vstv %s170
    %v172 = vmul.f32 %v171, %v39
    %v173 = vadd.f32 %v169, %v172
    %v174 = vmax.f32 %v173, 0.0
    %s175 = sld [smem:[#allocation2 + $0x65]]
    %v176 = vstv %s175
    %s177 = sld [smem:[#allocation2 + $0x1e]]
    %v178 = vstv %s177
    %v179 = vmul.f32 %v178, %v24
    %v180 = vadd.f32 %v176, %v179
    %s181 = sld [smem:[#allocation2 + $0x1f]]
    %v182 = vstv %s181
    %v183 = vmul.f32 %v182, %v27
    %v184 = vadd.f32 %v180, %v183
    %s185 = sld [smem:[#allocation2 + $0x20]]
    %v186 = vstv %s185
    %v187 = vmul.f32 %v186, %v30
    %v188 = vadd.f32 %v184, %v187
    %s189 = sld [smem:[#allocation2 + $0x21]]
    %v190 = vstv %s189
    %v191 = vmul.f32 %v190, %v33
    %v192 = vadd.f32 %v188, %v191
    %s193 = sld [smem:[#allocation2 + $0x22]]
    %v194 = vstv %s193
    %v195 = vmul.f32 %v194, %v36
    %v196 = vadd.f32 %v192, %v195
    %s197 = sld [smem:[#allocation2 + $0x23]]
    %v198 = vstv %s197
    %v199 = vmul.f32 %v198, %v39
    %v200 = vadd.f32 %v196, %v199
    %v201 = vmax.f32 %v200, 0.0
    %s202 = sld [smem:[#allocation2 + $0x66]]
    %v203 = vstv %s202
    %s204 = sld [smem:[#allocation2 + $0x24]]
    %v205 = vstv %s204
    %v206 = vmul.f32 %v205, %v24
    %v207 = vadd.f32 %v203, %v206
    %s208 = sld [smem:[#allocation2 + $0x25]]
    %v209 = vstv %s208
    %v210 = vmul.f32 %v209, %v27
    %v211 = vadd.f32 %v207, %v210
    %s212 = sld [smem:[#allocation2 + $0x26]]
    %v213 = vstv %s212
    %v214 = vmul.f32 %v213, %v30
    %v215 = vadd.f32 %v211, %v214
    %s216 = sld [smem:[#allocation2 + $0x27]]
    %v217 = vstv %s216
    %v218 = vmul.f32 %v217, %v33
    %v219 = vadd.f32 %v215, %v218
    %s220 = sld [smem:[#allocation2 + $0x28]]
    %v221 = vstv %s220
    %v222 = vmul.f32 %v221, %v36
    %v223 = vadd.f32 %v219, %v222
    %s224 = sld [smem:[#allocation2 + $0x29]]
    %v225 = vstv %s224
    %v226 = vmul.f32 %v225, %v39
    %v227 = vadd.f32 %v223, %v226
    %v228 = vmax.f32 %v227, 0.0
    %s229 = sld [smem:[#allocation2 + $0x67]]
    %v230 = vstv %s229
    %s231 = sld [smem:[#allocation2 + $0x2a]]
    %v232 = vstv %s231
    %v233 = vmul.f32 %v232, %v24
    %v234 = vadd.f32 %v230, %v233
    %s235 = sld [smem:[#allocation2 + $0x2b]]
    %v236 = vstv %s235
    %v237 = vmul.f32 %v236, %v27
    %v238 = vadd.f32 %v234, %v237
    %s239 = sld [smem:[#allocation2 + $0x2c]]
    %v240 = vstv %s239
    %v241 = vmul.f32 %v240, %v30
    %v242 = vadd.f32 %v238, %v241
    %s243 = sld [smem:[#allocation2 + $0x2d]]
    %v244 = vstv %s243
    %v245 = vmul.f32 %v244, %v33
    %v246 = vadd.f32 %v242, %v245
    %s247 = sld [smem:[#allocation2 + $0x2e]]
    %v248 = vstv %s247
    %v249 = vmul.f32 %v248, %v36
    %v250 = vadd.f32 %v246, %v249
    %s251 = sld [smem:[#allocation2 + $0x2f]]
    %v252 = vstv %s251
    %v253 = vmul.f32 %v252, %v39
    %v254 = vadd.f32 %v250, %v253
    %v255 = vmax.f32 %v254, 0.0
    %s256 = sld [smem:[#allocation2 + $0x68]]
    %v257 = vstv %s256
    %s258 = sld [smem:[#allocation2 + $0x30]]
    %v259 = vstv %s258
    %v260 = vmul.f32 %v259, %v24
    %v261 = vadd.f32 %v257, %v260
    %s262 = sld [smem:[#allocation2 + $0x31]]
    %v263 = vstv %s262
    %v264 = vmul.f32 %v263, %v27
    %v265 = vadd.f32 %v261, %v264
    %s266 = sld [smem:[#allocation2 + $0x32]]
    %v267 = vstv %s266
    %v268 = vmul.f32 %v267, %v30
    %v269 = vadd.f32 %v265, %v268
    %s270 = sld [smem:[#allocation2 + $0x33]]
    %v271 = vstv %s270
    %v272 = vmul.f32 %v271, %v33
    %v273 = vadd.f32 %v269, %v272
    %s274 = sld [smem:[#allocation2 + $0x34]]
    %v275 = vstv %s274
    %v276 = vmul.f32 %v275, %v36
    %v277 = vadd.f32 %v273, %v276
    %s278 = sld [smem:[#allocation2 + $0x35]]
    %v279 = vstv %s278
    %v280 = vmul.f32 %v279, %v39
    %v281 = vadd.f32 %v277, %v280
    %v282 = vmax.f32 %v281, 0.0
    %s283 = sld [smem:[#allocation2 + $0x69]]
    %v284 = vstv %s283
    %s285 = sld [smem:[#allocation2 + $0x36]]
    %v286 = vstv %s285
    %v287 = vmul.f32 %v286, %v24
    %v288 = vadd.f32 %v284, %v287
    %s289 = sld [smem:[#allocation2 + $0x37]]
    %v290 = vstv %s289
    %v291 = vmul.f32 %v290, %v27
    %v292 = vadd.f32 %v288, %v291
    %s293 = sld [smem:[#allocation2 + $0x38]]
    %v294 = vstv %s293
    %v295 = vmul.f32 %v294, %v30
    %v296 = vadd.f32 %v292, %v295
    %s297 = sld [smem:[#allocation2 + $0x39]]
    %v298 = vstv %s297
    %v299 = vmul.f32 %v298, %v33
    %v300 = vadd.f32 %v296, %v299
    %s301 = sld [smem:[#allocation2 + $0x3a]]
    %v302 = vstv %s301
    %v303 = vmul.f32 %v302, %v36
    %v304 = vadd.f32 %v300, %v303
    %s305 = sld [smem:[#allocation2 + $0x3b]]
    %v306 = vstv %s305
    %v307 = vmul.f32 %v306, %v39
    %v308 = vadd.f32 %v304, %v307
    %v309 = vmax.f32 %v308, 0.0
    %s310 = sld [smem:[#allocation2 + $0x6a]]
    %v311 = vstv %s310
    %s312 = sld [smem:[#allocation2 + $0x3c]]
    %v313 = vstv %s312
    %v314 = vmul.f32 %v313, %v24
    %v315 = vadd.f32 %v311, %v314
    %s316 = sld [smem:[#allocation2 + $0x3d]]
    %v317 = vstv %s316
    %v318 = vmul.f32 %v317, %v27
    %v319 = vadd.f32 %v315, %v318
    %s320 = sld [smem:[#allocation2 + $0x3e]]
    %v321 = vstv %s320
    %v322 = vmul.f32 %v321, %v30
    %v323 = vadd.f32 %v319, %v322
    %s324 = sld [smem:[#allocation2 + $0x3f]]
    %v325 = vstv %s324
    %v326 = vmul.f32 %v325, %v33
    %v327 = vadd.f32 %v323, %v326
    %s328 = sld [smem:[#allocation2 + $0x40]]
    %v329 = vstv %s328
    %v330 = vmul.f32 %v329, %v36
    %v331 = vadd.f32 %v327, %v330
    %s332 = sld [smem:[#allocation2 + $0x41]]
    %v333 = vstv %s332
    %v334 = vmul.f32 %v333, %v39
    %v335 = vadd.f32 %v331, %v334
    %v336 = vmax.f32 %v335, 0.0
    %s337 = sld [smem:[#allocation2 + $0x6b]]
    %v338 = vstv %s337
    %s339 = sld [smem:[#allocation2 + $0x42]]
    %v340 = vstv %s339
    %v341 = vmul.f32 %v340, %v24
    %v342 = vadd.f32 %v338, %v341
    %s343 = sld [smem:[#allocation2 + $0x43]]
    %v344 = vstv %s343
    %v345 = vmul.f32 %v344, %v27
    %v346 = vadd.f32 %v342, %v345
    %s347 = sld [smem:[#allocation2 + $0x44]]
    %v348 = vstv %s347
    %v349 = vmul.f32 %v348, %v30
    %v350 = vadd.f32 %v346, %v349
    %s351 = sld [smem:[#allocation2 + $0x45]]
    %v352 = vstv %s351
    %v353 = vmul.f32 %v352, %v33
    %v354 = vadd.f32 %v350, %v353
    %s355 = sld [smem:[#allocation2 + $0x46]]
    %v356 = vstv %s355
    %v357 = vmul.f32 %v356, %v36
    %v358 = vadd.f32 %v354, %v357
    %s359 = sld [smem:[#allocation2 + $0x47]]
    %v360 = vstv %s359
    %v361 = vmul.f32 %v360, %v39
    %v362 = vadd.f32 %v358, %v361
    %v363 = vmax.f32 %v362, 0.0
    %s364 = sld [smem:[#allocation2 + $0x6c]]
    %v365 = vstv %s364
    %s366 = sld [smem:[#allocation2 + $0x48]]
    %v367 = vstv %s366
    %v368 = vmul.f32 %v367, %v24
    %v369 = vadd.f32 %v365, %v368
    %s370 = sld [smem:[#allocation2 + $0x49]]
    %v371 = vstv %s370
    %v372 = vmul.f32 %v371, %v27
    %v373 = vadd.f32 %v369, %v372
    %s374 = sld [smem:[#allocation2 + $0x4a]]
    %v375 = vstv %s374
    %v376 = vmul.f32 %v375, %v30
    %v377 = vadd.f32 %v373, %v376
    %s378 = sld [smem:[#allocation2 + $0x4b]]
    %v379 = vstv %s378
    %v380 = vmul.f32 %v379, %v33
    %v381 = vadd.f32 %v377, %v380
    %s382 = sld [smem:[#allocation2 + $0x4c]]
    %v383 = vstv %s382
    %v384 = vmul.f32 %v383, %v36
    %v385 = vadd.f32 %v381, %v384
    %s386 = sld [smem:[#allocation2 + $0x4d]]
    %v387 = vstv %s386
    %v388 = vmul.f32 %v387, %v39
    %v389 = vadd.f32 %v385, %v388
    %v390 = vmax.f32 %v389, 0.0
    %s391 = sld [smem:[#allocation2 + $0x6d]]
    %v392 = vstv %s391
    %s393 = sld [smem:[#allocation2 + $0x4e]]
    %v394 = vstv %s393
    %v395 = vmul.f32 %v394, %v24
    %v396 = vadd.f32 %v392, %v395
    %s397 = sld [smem:[#allocation2 + $0x4f]]
    %v398 = vstv %s397
    %v399 = vmul.f32 %v398, %v27
    %v400 = vadd.f32 %v396, %v399
    %s401 = sld [smem:[#allocation2 + $0x50]]
    %v402 = vstv %s401
    %v403 = vmul.f32 %v402, %v30
    %v404 = vadd.f32 %v400, %v403
    %s405 = sld [smem:[#allocation2 + $0x51]]
    %v406 = vstv %s405
    %v407 = vmul.f32 %v406, %v33
    %v408 = vadd.f32 %v404, %v407
    %s409 = sld [smem:[#allocation2 + $0x52]]
    %v410 = vstv %s409
    %v411 = vmul.f32 %v410, %v36
    %v412 = vadd.f32 %v408, %v411
    %s413 = sld [smem:[#allocation2 + $0x53]]
    %v414 = vstv %s413
    %v415 = vmul.f32 %v414, %v39
    %v416 = vadd.f32 %v412, %v415
    %v417 = vmax.f32 %v416, 0.0
    %s418 = sld [smem:[#allocation2 + $0x6e]]
    %v419 = vstv %s418
    %s420 = sld [smem:[#allocation2 + $0x54]]
    %v421 = vstv %s420
    %v422 = vmul.f32 %v421, %v24
    %v423 = vadd.f32 %v419, %v422
    %s424 = sld [smem:[#allocation2 + $0x55]]
    %v425 = vstv %s424
    %v426 = vmul.f32 %v425, %v27
    %v427 = vadd.f32 %v423, %v426
    %s428 = sld [smem:[#allocation2 + $0x56]]
    %v429 = vstv %s428
    %v430 = vmul.f32 %v429, %v30
    %v431 = vadd.f32 %v427, %v430
    %s432 = sld [smem:[#allocation2 + $0x57]]
    %v433 = vstv %s432
    %v434 = vmul.f32 %v433, %v33
    %v435 = vadd.f32 %v431, %v434
    %s436 = sld [smem:[#allocation2 + $0x58]]
    %v437 = vstv %s436
    %v438 = vmul.f32 %v437, %v36
    %v439 = vadd.f32 %v435, %v438
    %s440 = sld [smem:[#allocation2 + $0x59]]
    %v441 = vstv %s440
    %v442 = vmul.f32 %v441, %v39
    %v443 = vadd.f32 %v439, %v442
    %v444 = vmax.f32 %v443, 0.0
    %s445 = sld [smem:[#allocation2 + $0x6f]]
    %v446 = vstv %s445
    %s447 = sld [smem:[#allocation2 + $0x5a]]
    %v448 = vstv %s447
    %v449 = vmul.f32 %v448, %v24
    %v450 = vadd.f32 %v446, %v449
    %s451 = sld [smem:[#allocation2 + $0x5b]]
    %v452 = vstv %s451
    %v453 = vmul.f32 %v452, %v27
    %v454 = vadd.f32 %v450, %v453
    %s455 = sld [smem:[#allocation2 + $0x5c]]
    %v456 = vstv %s455
    %v457 = vmul.f32 %v456, %v30
    %v458 = vadd.f32 %v454, %v457
    %s459 = sld [smem:[#allocation2 + $0x5d]]
    %v460 = vstv %s459
    %v461 = vmul.f32 %v460, %v33
    %v462 = vadd.f32 %v458, %v461
    %s463 = sld [smem:[#allocation2 + $0x5e]]
    %v464 = vstv %s463
    %v465 = vmul.f32 %v464, %v36
    %v466 = vadd.f32 %v462, %v465
    %s467 = sld [smem:[#allocation2 + $0x5f]]
    %v468 = vstv %s467
    %v469 = vmul.f32 %v468, %v39
    %v470 = vadd.f32 %v466, %v469
    %v471 = vmax.f32 %v470, 0.0
    %s472 = sld [smem:[#allocation2 + $0xf0]]
    %v473 = vstv %s472
    %s474 = sld [smem:[#allocation2 + $0x70]]
    %v475 = vstv %s474
    %v476 = vmul.f32 %v475, %v66
    %v477 = vadd.f32 %v473, %v476
    %s478 = sld [smem:[#allocation2 + $0x71]]
    %v479 = vstv %s478
    %v480 = vmul.f32 %v479, %v93
    %v481 = vadd.f32 %v477, %v480
    %s482 = sld [smem:[#allocation2 + $0x72]]
    %v483 = vstv %s482
    %v484 = vmul.f32 %v483, %v120
    %v485 = vadd.f32 %v481, %v484
    %s486 = sld [smem:[#allocation2 + $0x73]]
    %v487 = vstv %s486
    %v488 = vmul.f32 %v487, %v147
    %v489 = vadd.f32 %v485, %v488
    %s490 = sld [smem:[#allocation2 + $0x74]]
    %v491 = vstv %s490
    %v492 = vmul.f32 %v491, %v174
    %v493 = vadd.f32 %v489, %v492
    %s494 = sld [smem:[#allocation2 + $0x75]]
    %v495 = vstv %s494
    %v496 = vmul.f32 %v495, %v201
    %v497 = vadd.f32 %v493, %v496
    %s498 = sld [smem:[#allocation2 + $0x76]]
    %v499 = vstv %s498
    %v500 = vmul.f32 %v499, %v228
    %v501 = vadd.f32 %v497, %v500
    %s502 = sld [smem:[#allocation2 + $0x77]]
    %v503 = vstv %s502
    %v504 = vmul.f32 %v503, %v255
    %v505 = vadd.f32 %v501, %v504
    %s506 = sld [smem:[#allocation2 + $0x78]]
    %v507 = vstv %s506
    %v508 = vmul.f32 %v507, %v282
    %v509 = vadd.f32 %v505, %v508
    %s510 = sld [smem:[#allocation2 + $0x79]]
    %v511 = vstv %s510
    %v512 = vmul.f32 %v511, %v309
    %v513 = vadd.f32 %v509, %v512
    %s514 = sld [smem:[#allocation2 + $0x7a]]
    %v515 = vstv %s514
    %v516 = vmul.f32 %v515, %v336
    %v517 = vadd.f32 %v513, %v516
    %s518 = sld [smem:[#allocation2 + $0x7b]]
    %v519 = vstv %s518
    %v520 = vmul.f32 %v519, %v363
    %v521 = vadd.f32 %v517, %v520
    %s522 = sld [smem:[#allocation2 + $0x7c]]
    %v523 = vstv %s522
    %v524 = vmul.f32 %v523, %v390
    %v525 = vadd.f32 %v521, %v524
    %s526 = sld [smem:[#allocation2 + $0x7d]]
    %v527 = vstv %s526
    %v528 = vmul.f32 %v527, %v417
    %v529 = vadd.f32 %v525, %v528
    %s530 = sld [smem:[#allocation2 + $0x7e]]
    %v531 = vstv %s530
    %v532 = vmul.f32 %v531, %v444
    %v533 = vadd.f32 %v529, %v532
    %s534 = sld [smem:[#allocation2 + $0x7f]]
    %v535 = vstv %s534
    %v536 = vmul.f32 %v535, %v471
    %v537 = vadd.f32 %v533, %v536
    %v538 = vmax.f32 %v537, 0.0
    %s539 = sld [smem:[#allocation2 + $0xf1]]
    %v540 = vstv %s539
    %s541 = sld [smem:[#allocation2 + $0x80]]
    %v542 = vstv %s541
    %v543 = vmul.f32 %v542, %v66
    %v544 = vadd.f32 %v540, %v543
    %s545 = sld [smem:[#allocation2 + $0x81]]
    %v546 = vstv %s545
    %v547 = vmul.f32 %v546, %v93
    %v548 = vadd.f32 %v544, %v547
    %s549 = sld [smem:[#allocation2 + $0x82]]
    %v550 = vstv %s549
    %v551 = vmul.f32 %v550, %v120
    %v552 = vadd.f32 %v548, %v551
    %s553 = sld [smem:[#allocation2 + $0x83]]
    %v554 = vstv %s553
    %v555 = vmul.f32 %v554, %v147
    %v556 = vadd.f32 %v552, %v555
    %s557 = sld [smem:[#allocation2 + $0x84]]
    %v558 = vstv %s557
    %v559 = vmul.f32 %v558, %v174
    %v560 = vadd.f32 %v556, %v559
    %s561 = sld [smem:[#allocation2 + $0x85]]
    %v562 = vstv %s561
    %v563 = vmul.f32 %v562, %v201
    %v564 = vadd.f32 %v560, %v563
    %s565 = sld [smem:[#allocation2 + $0x86]]
    %v566 = vstv %s565
    %v567 = vmul.f32 %v566, %v228
    %v568 = vadd.f32 %v564, %v567
    %s569 = sld [smem:[#allocation2 + $0x87]]
    %v570 = vstv %s569
    %v571 = vmul.f32 %v570, %v255
    %v572 = vadd.f32 %v568, %v571
    %s573 = sld [smem:[#allocation2 + $0x88]]
    %v574 = vstv %s573
    %v575 = vmul.f32 %v574, %v282
    %v576 = vadd.f32 %v572, %v575
    %s577 = sld [smem:[#allocation2 + $0x89]]
    %v578 = vstv %s577
    %v579 = vmul.f32 %v578, %v309
    %v580 = vadd.f32 %v576, %v579
    %s581 = sld [smem:[#allocation2 + $0x8a]]
    %v582 = vstv %s581
    %v583 = vmul.f32 %v582, %v336
    %v584 = vadd.f32 %v580, %v583
    %s585 = sld [smem:[#allocation2 + $0x8b]]
    %v586 = vstv %s585
    %v587 = vmul.f32 %v586, %v363
    %v588 = vadd.f32 %v584, %v587
    %s589 = sld [smem:[#allocation2 + $0x8c]]
    %v590 = vstv %s589
    %v591 = vmul.f32 %v590, %v390
    %v592 = vadd.f32 %v588, %v591
    %s593 = sld [smem:[#allocation2 + $0x8d]]
    %v594 = vstv %s593
    %v595 = vmul.f32 %v594, %v417
    %v596 = vadd.f32 %v592, %v595
    %s597 = sld [smem:[#allocation2 + $0x8e]]
    %v598 = vstv %s597
    %v599 = vmul.f32 %v598, %v444
    %v600 = vadd.f32 %v596, %v599
    %s601 = sld [smem:[#allocation2 + $0x8f]]
    %v602 = vstv %s601
    %v603 = vmul.f32 %v602, %v471
    %v604 = vadd.f32 %v600, %v603
    %v605 = vmax.f32 %v604, 0.0
    %s606 = sld [smem:[#allocation2 + $0xf2]]
    %v607 = vstv %s606
    %s608 = sld [smem:[#allocation2 + $0x90]]
    %v609 = vstv %s608
    %v610 = vmul.f32 %v609, %v66
    %v611 = vadd.f32 %v607, %v610
    %s612 = sld [smem:[#allocation2 + $0x91]]
    %v613 = vstv %s612
    %v614 = vmul.f32 %v613, %v93
    %v615 = vadd.f32 %v611, %v614
    %s616 = sld [smem:[#allocation2 + $0x92]]
    %v617 = vstv %s616
    %v618 = vmul.f32 %v617, %v120
    %v619 = vadd.f32 %v615, %v618
    %s620 = sld [smem:[#allocation2 + $0x93]]
    %v621 = vstv %s620
    %v622 = vmul.f32 %v621, %v147
    %v623 = vadd.f32 %v619, %v622
    %s624 = sld [smem:[#allocation2 + $0x94]]
    %v625 = vstv %s624
    %v626 = vmul.f32 %v625, %v174
    %v627 = vadd.f32 %v623, %v626
    %s628 = sld [smem:[#allocation2 + $0x95]]
    %v629 = vstv %s628
    %v630 = vmul.f32 %v629, %v201
    %v631 = vadd.f32 %v627, %v630
    %s632 = sld [smem:[#allocation2 + $0x96]]
    %v633 = vstv %s632
    %v634 = vmul.f32 %v633, %v228
    %v635 = vadd.f32 %v631, %v634
    %s636 = sld [smem:[#allocation2 + $0x97]]
    %v637 = vstv %s636
    %v638 = vmul.f32 %v637, %v255
    %v639 = vadd.f32 %v635, %v638
    %s640 = sld [smem:[#allocation2 + $0x98]]
    %v641 = vstv %s640
    %v642 = vmul.f32 %v641, %v282
    %v643 = vadd.f32 %v639, %v642
    %s644 = sld [smem:[#allocation2 + $0x99]]
    %v645 = vstv %s644
    %v646 = vmul.f32 %v645, %v309
    %v647 = vadd.f32 %v643, %v646
    %s648 = sld [smem:[#allocation2 + $0x9a]]
    %v649 = vstv %s648
    %v650 = vmul.f32 %v649, %v336
    %v651 = vadd.f32 %v647, %v650
    %s652 = sld [smem:[#allocation2 + $0x9b]]
    %v653 = vstv %s652
    %v654 = vmul.f32 %v653, %v363
    %v655 = vadd.f32 %v651, %v654
    %s656 = sld [smem:[#allocation2 + $0x9c]]
    %v657 = vstv %s656
    %v658 = vmul.f32 %v657, %v390
    %v659 = vadd.f32 %v655, %v658
    %s660 = sld [smem:[#allocation2 + $0x9d]]
    %v661 = vstv %s660
    %v662 = vmul.f32 %v661, %v417
    %v663 = vadd.f32 %v659, %v662
    %s664 = sld [smem:[#allocation2 + $0x9e]]
    %v665 = vstv %s664
    %v666 = vmul.f32 %v665, %v444
    %v667 = vadd.f32 %v663, %v666
    %s668 = sld [smem:[#allocation2 + $0x9f]]
    %v669 = vstv %s668
    %v670 = vmul.f32 %v669, %v471
    %v671 = vadd.f32 %v667, %v670
    %v672 = vmax.f32 %v671, 0.0
    %s673 = sld [smem:[#allocation2 + $0xf3]]
    %v674 = vstv %s673
    %s675 = sld [smem:[#allocation2 + $0xa0]]
    %v676 = vstv %s675
    %v677 = vmul.f32 %v676, %v66
    %v678 = vadd.f32 %v674, %v677
    %s679 = sld [smem:[#allocation2 + $0xa1]]
    %v680 = vstv %s679
    %v681 = vmul.f32 %v680, %v93
    %v682 = vadd.f32 %v678, %v681
    %s683 = sld [smem:[#allocation2 + $0xa2]]
    %v684 = vstv %s683
    %v685 = vmul.f32 %v684, %v120
    %v686 = vadd.f32 %v682, %v685
    %s687 = sld [smem:[#allocation2 + $0xa3]]
    %v688 = vstv %s687
    %v689 = vmul.f32 %v688, %v147
    %v690 = vadd.f32 %v686, %v689
    %s691 = sld [smem:[#allocation2 + $0xa4]]
    %v692 = vstv %s691
    %v693 = vmul.f32 %v692, %v174
    %v694 = vadd.f32 %v690, %v693
    %s695 = sld [smem:[#allocation2 + $0xa5]]
    %v696 = vstv %s695
    %v697 = vmul.f32 %v696, %v201
    %v698 = vadd.f32 %v694, %v697
    %s699 = sld [smem:[#allocation2 + $0xa6]]
    %v700 = vstv %s699
    %v701 = vmul.f32 %v700, %v228
    %v702 = vadd.f32 %v698, %v701
    %s703 = sld [smem:[#allocation2 + $0xa7]]
    %v704 = vstv %s703
    %v705 = vmul.f32 %v704, %v255
    %v706 = vadd.f32 %v702, %v705
    %s707 = sld [smem:[#allocation2 + $0xa8]]
    %v708 = vstv %s707
    %v709 = vmul.f32 %v708, %v282
    %v710 = vadd.f32 %v706, %v709
    %s711 = sld [smem:[#allocation2 + $0xa9]]
    %v712 = vstv %s711
    %v713 = vmul.f32 %v712, %v309
    %v714 = vadd.f32 %v710, %v713
    %s715 = sld [smem:[#allocation2 + $0xaa]]
    %v716 = vstv %s715
    %v717 = vmul.f32 %v716, %v336
    %v718 = vadd.f32 %v714, %v717
    %s719 = sld [smem:[#allocation2 + $0xab]]
    %v720 = vstv %s719
    %v721 = vmul.f32 %v720, %v363
    %v722 = vadd.f32 %v718, %v721
    %s723 = sld [smem:[#allocation2 + $0xac]]
    %v724 = vstv %s723
    %v725 = vmul.f32 %v724, %v390
    %v726 = vadd.f32 %v722, %v725
    %s727 = sld [smem:[#allocation2 + $0xad]]
    %v728 = vstv %s727
    %v729 = vmul.f32 %v728, %v417
    %v730 = vadd.f32 %v726, %v729
    %s731 = sld [smem:[#allocation2 + $0xae]]
    %v732 = vstv %s731
    %v733 = vmul.f32 %v732, %v444
    %v734 = vadd.f32 %v730, %v733
    %s735 = sld [smem:[#allocation2 + $0xaf]]
    %v736 = vstv %s735
    %v737 = vmul.f32 %v736, %v471
    %v738 = vadd.f32 %v734, %v737
    %v739 = vmax.f32 %v738, 0.0
    %s740 = sld [smem:[#allocation2 + $0xf4]]
    %v741 = vstv %s740
    %s742 = sld [smem:[#allocation2 + $0xb0]]
    %v743 = vstv %s742
    %v744 = vmul.f32 %v743, %v66
    %v745 = vadd.f32 %v741, %v744
    %s746 = sld [smem:[#allocation2 + $0xb1]]
    %v747 = vstv %s746
    %v748 = vmul.f32 %v747, %v93
    %v749 = vadd.f32 %v745, %v748
    %s750 = sld [smem:[#allocation2 + $0xb2]]
    %v751 = vstv %s750
    %v752 = vmul.f32 %v751, %v120
    %v753 = vadd.f32 %v749, %v752
    %s754 = sld [smem:[#allocation2 + $0xb3]]
    %v755 = vstv %s754
    %v756 = vmul.f32 %v755, %v147
    %v757 = vadd.f32 %v753, %v756
    %s758 = sld [smem:[#allocation2 + $0xb4]]
    %v759 = vstv %s758
    %v760 = vmul.f32 %v759, %v174
    %v761 = vadd.f32 %v757, %v760
    %s762 = sld [smem:[#allocation2 + $0xb5]]
    %v763 = vstv %s762
    %v764 = vmul.f32 %v763, %v201
    %v765 = vadd.f32 %v761, %v764
    %s766 = sld [smem:[#allocation2 + $0xb6]]
    %v767 = vstv %s766
    %v768 = vmul.f32 %v767, %v228
    %v769 = vadd.f32 %v765, %v768
    %s770 = sld [smem:[#allocation2 + $0xb7]]
    %v771 = vstv %s770
    %v772 = vmul.f32 %v771, %v255
    %v773 = vadd.f32 %v769, %v772
    %s774 = sld [smem:[#allocation2 + $0xb8]]
    %v775 = vstv %s774
    %v776 = vmul.f32 %v775, %v282
    %v777 = vadd.f32 %v773, %v776
    %s778 = sld [smem:[#allocation2 + $0xb9]]
    %v779 = vstv %s778
    %v780 = vmul.f32 %v779, %v309
    %v781 = vadd.f32 %v777, %v780
    %s782 = sld [smem:[#allocation2 + $0xba]]
    %v783 = vstv %s782
    %v784 = vmul.f32 %v783, %v336
    %v785 = vadd.f32 %v781, %v784
    %s786 = sld [smem:[#allocation2 + $0xbb]]
    %v787 = vstv %s786
    %v788 = vmul.f32 %v787, %v363
    %v789 = vadd.f32 %v785, %v788
    %s790 = sld [smem:[#allocation2 + $0xbc]]
    %v791 = vstv %s790
    %v792 = vmul.f32 %v791, %v390
    %v793 = vadd.f32 %v789, %v792
    %s794 = sld [smem:[#allocation2 + $0xbd]]
    %v795 = vstv %s794
    %v796 = vmul.f32 %v795, %v417
    %v797 = vadd.f32 %v793, %v796
    %s798 = sld [smem:[#allocation2 + $0xbe]]
    %v799 = vstv %s798
    %v800 = vmul.f32 %v799, %v444
    %v801 = vadd.f32 %v797, %v800
    %s802 = sld [smem:[#allocation2 + $0xbf]]
    %v803 = vstv %s802
    %v804 = vmul.f32 %v803, %v471
    %v805 = vadd.f32 %v801, %v804
    %v806 = vmax.f32 %v805, 0.0
    %s807 = sld [smem:[#allocation2 + $0xf5]]
    %v808 = vstv %s807
    %s809 = sld [smem:[#allocation2 + $0xc0]]
    %v810 = vstv %s809
    %v811 = vmul.f32 %v810, %v66
    %v812 = vadd.f32 %v808, %v811
    %s813 = sld [smem:[#allocation2 + $0xc1]]
    %v814 = vstv %s813
    %v815 = vmul.f32 %v814, %v93
    %v816 = vadd.f32 %v812, %v815
    %s817 = sld [smem:[#allocation2 + $0xc2]]
    %v818 = vstv %s817
    %v819 = vmul.f32 %v818, %v120
    %v820 = vadd.f32 %v816, %v819
    %s821 = sld [smem:[#allocation2 + $0xc3]]
    %v822 = vstv %s821
    %v823 = vmul.f32 %v822, %v147
    %v824 = vadd.f32 %v820, %v823
    %s825 = sld [smem:[#allocation2 + $0xc4]]
    %v826 = vstv %s825
    %v827 = vmul.f32 %v826, %v174
    %v828 = vadd.f32 %v824, %v827
    %s829 = sld [smem:[#allocation2 + $0xc5]]
    %v830 = vstv %s829
    %v831 = vmul.f32 %v830, %v201
    %v832 = vadd.f32 %v828, %v831
    %s833 = sld [smem:[#allocation2 + $0xc6]]
    %v834 = vstv %s833
    %v835 = vmul.f32 %v834, %v228
    %v836 = vadd.f32 %v832, %v835
    %s837 = sld [smem:[#allocation2 + $0xc7]]
    %v838 = vstv %s837
    %v839 = vmul.f32 %v838, %v255
    %v840 = vadd.f32 %v836, %v839
    %s841 = sld [smem:[#allocation2 + $0xc8]]
    %v842 = vstv %s841
    %v843 = vmul.f32 %v842, %v282
    %v844 = vadd.f32 %v840, %v843
    %s845 = sld [smem:[#allocation2 + $0xc9]]
    %v846 = vstv %s845
    %v847 = vmul.f32 %v846, %v309
    %v848 = vadd.f32 %v844, %v847
    %s849 = sld [smem:[#allocation2 + $0xca]]
    %v850 = vstv %s849
    %v851 = vmul.f32 %v850, %v336
    %v852 = vadd.f32 %v848, %v851
    %s853 = sld [smem:[#allocation2 + $0xcb]]
    %v854 = vstv %s853
    %v855 = vmul.f32 %v854, %v363
    %v856 = vadd.f32 %v852, %v855
    %s857 = sld [smem:[#allocation2 + $0xcc]]
    %v858 = vstv %s857
    %v859 = vmul.f32 %v858, %v390
    %v860 = vadd.f32 %v856, %v859
    %s861 = sld [smem:[#allocation2 + $0xcd]]
    %v862 = vstv %s861
    %v863 = vmul.f32 %v862, %v417
    %v864 = vadd.f32 %v860, %v863
    %s865 = sld [smem:[#allocation2 + $0xce]]
    %v866 = vstv %s865
    %v867 = vmul.f32 %v866, %v444
    %v868 = vadd.f32 %v864, %v867
    %s869 = sld [smem:[#allocation2 + $0xcf]]
    %v870 = vstv %s869
    %v871 = vmul.f32 %v870, %v471
    %v872 = vadd.f32 %v868, %v871
    %v873 = vmax.f32 %v872, 0.0
    %s874 = sld [smem:[#allocation2 + $0xf6]]
    %v875 = vstv %s874
    %s876 = sld [smem:[#allocation2 + $0xd0]]
    %v877 = vstv %s876
    %v878 = vmul.f32 %v877, %v66
    %v879 = vadd.f32 %v875, %v878
    %s880 = sld [smem:[#allocation2 + $0xd1]]
    %v881 = vstv %s880
    %v882 = vmul.f32 %v881, %v93
    %v883 = vadd.f32 %v879, %v882
    %s884 = sld [smem:[#allocation2 + $0xd2]]
    %v885 = vstv %s884
    %v886 = vmul.f32 %v885, %v120
    %v887 = vadd.f32 %v883, %v886
    %s888 = sld [smem:[#allocation2 + $0xd3]]
    %v889 = vstv %s888
    %v890 = vmul.f32 %v889, %v147
    %v891 = vadd.f32 %v887, %v890
    %s892 = sld [smem:[#allocation2 + $0xd4]]
    %v893 = vstv %s892
    %v894 = vmul.f32 %v893, %v174
    %v895 = vadd.f32 %v891, %v894
    %s896 = sld [smem:[#allocation2 + $0xd5]]
    %v897 = vstv %s896
    %v898 = vmul.f32 %v897, %v201
    %v899 = vadd.f32 %v895, %v898
    %s900 = sld [smem:[#allocation2 + $0xd6]]
    %v901 = vstv %s900
    %v902 = vmul.f32 %v901, %v228
    %v903 = vadd.f32 %v899, %v902
    %s904 = sld [smem:[#allocation2 + $0xd7]]
    %v905 = vstv %s904
    %v906 = vmul.f32 %v905, %v255
    %v907 = vadd.f32 %v903, %v906
    %s908 = sld [smem:[#allocation2 + $0xd8]]
    %v909 = vstv %s908
    %v910 = vmul.f32 %v909, %v282
    %v911 = vadd.f32 %v907, %v910
    %s912 = sld [smem:[#allocation2 + $0xd9]]
    %v913 = vstv %s912
    %v914 = vmul.f32 %v913, %v309
    %v915 = vadd.f32 %v911, %v914
    %s916 = sld [smem:[#allocation2 + $0xda]]
    %v917 = vstv %s916
    %v918 = vmul.f32 %v917, %v336
    %v919 = vadd.f32 %v915, %v918
    %s920 = sld [smem:[#allocation2 + $0xdb]]
    %v921 = vstv %s920
    %v922 = vmul.f32 %v921, %v363
    %v923 = vadd.f32 %v919, %v922
    %s924 = sld [smem:[#allocation2 + $0xdc]]
    %v925 = vstv %s924
    %v926 = vmul.f32 %v925, %v390
    %v927 = vadd.f32 %v923, %v926
    %s928 = sld [smem:[#allocation2 + $0xdd]]
    %v929 = vstv %s928
    %v930 = vmul.f32 %v929, %v417
    %v931 = vadd.f32 %v927, %v930
    %s932 = sld [smem:[#allocation2 + $0xde]]
    %v933 = vstv %s932
    %v934 = vmul.f32 %v933, %v444
    %v935 = vadd.f32 %v931, %v934
    %s936 = sld [smem:[#allocation2 + $0xdf]]
    %v937 = vstv %s936
    %v938 = vmul.f32 %v937, %v471
    %v939 = vadd.f32 %v935, %v938
    %v940 = vmax.f32 %v939, 0.0
    %s941 = sld [smem:[#allocation2 + $0xf7]]
    %v942 = vstv %s941
    %s943 = sld [smem:[#allocation2 + $0xe0]]
    %v944 = vstv %s943
    %v945 = vmul.f32 %v944, %v66
    %v946 = vadd.f32 %v942, %v945
    %s947 = sld [smem:[#allocation2 + $0xe1]]
    %v948 = vstv %s947
    %v949 = vmul.f32 %v948, %v93
    %v950 = vadd.f32 %v946, %v949
    %s951 = sld [smem:[#allocation2 + $0xe2]]
    %v952 = vstv %s951
    %v953 = vmul.f32 %v952, %v120
    %v954 = vadd.f32 %v950, %v953
    %s955 = sld [smem:[#allocation2 + $0xe3]]
    %v956 = vstv %s955
    %v957 = vmul.f32 %v956, %v147
    %v958 = vadd.f32 %v954, %v957
    %s959 = sld [smem:[#allocation2 + $0xe4]]
    %v960 = vstv %s959
    %v961 = vmul.f32 %v960, %v174
    %v962 = vadd.f32 %v958, %v961
    %s963 = sld [smem:[#allocation2 + $0xe5]]
    %v964 = vstv %s963
    %v965 = vmul.f32 %v964, %v201
    %v966 = vadd.f32 %v962, %v965
    %s967 = sld [smem:[#allocation2 + $0xe6]]
    %v968 = vstv %s967
    %v969 = vmul.f32 %v968, %v228
    %v970 = vadd.f32 %v966, %v969
    %s971 = sld [smem:[#allocation2 + $0xe7]]
    %v972 = vstv %s971
    %v973 = vmul.f32 %v972, %v255
    %v974 = vadd.f32 %v970, %v973
    %s975 = sld [smem:[#allocation2 + $0xe8]]
    %v976 = vstv %s975
    %v977 = vmul.f32 %v976, %v282
    %v978 = vadd.f32 %v974, %v977
    %s979 = sld [smem:[#allocation2 + $0xe9]]
    %v980 = vstv %s979
    %v981 = vmul.f32 %v980, %v309
    %v982 = vadd.f32 %v978, %v981
    %s983 = sld [smem:[#allocation2 + $0xea]]
    %v984 = vstv %s983
    %v985 = vmul.f32 %v984, %v336
    %v986 = vadd.f32 %v982, %v985
    %s987 = sld [smem:[#allocation2 + $0xeb]]
    %v988 = vstv %s987
    %v989 = vmul.f32 %v988, %v363
    %v990 = vadd.f32 %v986, %v989
    %s991 = sld [smem:[#allocation2 + $0xec]]
    %v992 = vstv %s991
    %v993 = vmul.f32 %v992, %v390
    %v994 = vadd.f32 %v990, %v993
    %s995 = sld [smem:[#allocation2 + $0xed]]
    %v996 = vstv %s995
    %v997 = vmul.f32 %v996, %v417
    %v998 = vadd.f32 %v994, %v997
    %s999 = sld [smem:[#allocation2 + $0xee]]
    %v1000 = vstv %s999
    %v1001 = vmul.f32 %v1000, %v444
    %v1002 = vadd.f32 %v998, %v1001
    %s1003 = sld [smem:[#allocation2 + $0xef]]
    %v1004 = vstv %s1003
    %v1005 = vmul.f32 %v1004, %v471
    %v1006 = vadd.f32 %v1002, %v1005
    %v1007 = vmax.f32 %v1006, 0.0
    %s1008 = sld [smem:[#allocation2 + $0x138]]
    %v1009 = vstv %s1008
    %s1010 = sld [smem:[#allocation2 + $0xf8]]
    %v1011 = vstv %s1010
    %v1012 = vmul.f32 %v1011, %v538
    %v1013 = vadd.f32 %v1009, %v1012
    %s1014 = sld [smem:[#allocation2 + $0xf9]]
    %v1015 = vstv %s1014
    %v1016 = vmul.f32 %v1015, %v605
    %v1017 = vadd.f32 %v1013, %v1016
    %s1018 = sld [smem:[#allocation2 + $0xfa]]
    %v1019 = vstv %s1018
    %v1020 = vmul.f32 %v1019, %v672
    %v1021 = vadd.f32 %v1017, %v1020
    %s1022 = sld [smem:[#allocation2 + $0xfb]]
    %v1023 = vstv %s1022
    %v1024 = vmul.f32 %v1023, %v739
    %v1025 = vadd.f32 %v1021, %v1024
    %s1026 = sld [smem:[#allocation2 + $0xfc]]
    %v1027 = vstv %s1026
    %v1028 = vmul.f32 %v1027, %v806
    %v1029 = vadd.f32 %v1025, %v1028
    %s1030 = sld [smem:[#allocation2 + $0xfd]]
    %v1031 = vstv %s1030
    %v1032 = vmul.f32 %v1031, %v873
    %v1033 = vadd.f32 %v1029, %v1032
    %s1034 = sld [smem:[#allocation2 + $0xfe]]
    %v1035 = vstv %s1034
    %v1036 = vmul.f32 %v1035, %v940
    %v1037 = vadd.f32 %v1033, %v1036
    %s1038 = sld [smem:[#allocation2 + $0xff]]
    %v1039 = vstv %s1038
    %v1040 = vmul.f32 %v1039, %v1007
    %v1041 = vadd.f32 %v1037, %v1040
    %v1042 = vmax.f32 %v1041, 0.0
    %s1043 = sld [smem:[#allocation2 + $0x139]]
    %v1044 = vstv %s1043
    %s1045 = sld [smem:[#allocation2 + $0x100]]
    %v1046 = vstv %s1045
    %v1047 = vmul.f32 %v1046, %v538
    %v1048 = vadd.f32 %v1044, %v1047
    %s1049 = sld [smem:[#allocation2 + $0x101]]
    %v1050 = vstv %s1049
    %v1051 = vmul.f32 %v1050, %v605
    %v1052 = vadd.f32 %v1048, %v1051
    %s1053 = sld [smem:[#allocation2 + $0x102]]
    %v1054 = vstv %s1053
    %v1055 = vmul.f32 %v1054, %v672
    %v1056 = vadd.f32 %v1052, %v1055
    %s1057 = sld [smem:[#allocation2 + $0x103]]
    %v1058 = vstv %s1057
    %v1059 = vmul.f32 %v1058, %v739
    %v1060 = vadd.f32 %v1056, %v1059
    %s1061 = sld [smem:[#allocation2 + $0x104]]
    %v1062 = vstv %s1061
    %v1063 = vmul.f32 %v1062, %v806
    %v1064 = vadd.f32 %v1060, %v1063
    %s1065 = sld [smem:[#allocation2 + $0x105]]
    %v1066 = vstv %s1065
    %v1067 = vmul.f32 %v1066, %v873
    %v1068 = vadd.f32 %v1064, %v1067
    %s1069 = sld [smem:[#allocation2 + $0x106]]
    %v1070 = vstv %s1069
    %v1071 = vmul.f32 %v1070, %v940
    %v1072 = vadd.f32 %v1068, %v1071
    %s1073 = sld [smem:[#allocation2 + $0x107]]
    %v1074 = vstv %s1073
    %v1075 = vmul.f32 %v1074, %v1007
    %v1076 = vadd.f32 %v1072, %v1075
    %v1077 = vmax.f32 %v1076, 0.0
    %s1078 = sld [smem:[#allocation2 + $0x13a]]
    %v1079 = vstv %s1078
    %s1080 = sld [smem:[#allocation2 + $0x108]]
    %v1081 = vstv %s1080
    %v1082 = vmul.f32 %v1081, %v538
    %v1083 = vadd.f32 %v1079, %v1082
    %s1084 = sld [smem:[#allocation2 + $0x109]]
    %v1085 = vstv %s1084
    %v1086 = vmul.f32 %v1085, %v605
    %v1087 = vadd.f32 %v1083, %v1086
    %s1088 = sld [smem:[#allocation2 + $0x10a]]
    %v1089 = vstv %s1088
    %v1090 = vmul.f32 %v1089, %v672
    %v1091 = vadd.f32 %v1087, %v1090
    %s1092 = sld [smem:[#allocation2 + $0x10b]]
    %v1093 = vstv %s1092
    %v1094 = vmul.f32 %v1093, %v739
    %v1095 = vadd.f32 %v1091, %v1094
    %s1096 = sld [smem:[#allocation2 + $0x10c]]
    %v1097 = vstv %s1096
    %v1098 = vmul.f32 %v1097, %v806
    %v1099 = vadd.f32 %v1095, %v1098
    %s1100 = sld [smem:[#allocation2 + $0x10d]]
    %v1101 = vstv %s1100
    %v1102 = vmul.f32 %v1101, %v873
    %v1103 = vadd.f32 %v1099, %v1102
    %s1104 = sld [smem:[#allocation2 + $0x10e]]
    %v1105 = vstv %s1104
    %v1106 = vmul.f32 %v1105, %v940
    %v1107 = vadd.f32 %v1103, %v1106
    %s1108 = sld [smem:[#allocation2 + $0x10f]]
    %v1109 = vstv %s1108
    %v1110 = vmul.f32 %v1109, %v1007
    %v1111 = vadd.f32 %v1107, %v1110
    %v1112 = vmax.f32 %v1111, 0.0
    %s1113 = sld [smem:[#allocation2 + $0x13b]]
    %v1114 = vstv %s1113
    %s1115 = sld [smem:[#allocation2 + $0x110]]
    %v1116 = vstv %s1115
    %v1117 = vmul.f32 %v1116, %v538
    %v1118 = vadd.f32 %v1114, %v1117
    %s1119 = sld [smem:[#allocation2 + $0x111]]
    %v1120 = vstv %s1119
    %v1121 = vmul.f32 %v1120, %v605
    %v1122 = vadd.f32 %v1118, %v1121
    %s1123 = sld [smem:[#allocation2 + $0x112]]
    %v1124 = vstv %s1123
    %v1125 = vmul.f32 %v1124, %v672
    %v1126 = vadd.f32 %v1122, %v1125
    %s1127 = sld [smem:[#allocation2 + $0x113]]
    %v1128 = vstv %s1127
    %v1129 = vmul.f32 %v1128, %v739
    %v1130 = vadd.f32 %v1126, %v1129
    %s1131 = sld [smem:[#allocation2 + $0x114]]
    %v1132 = vstv %s1131
    %v1133 = vmul.f32 %v1132, %v806
    %v1134 = vadd.f32 %v1130, %v1133
    %s1135 = sld [smem:[#allocation2 + $0x115]]
    %v1136 = vstv %s1135
    %v1137 = vmul.f32 %v1136, %v873
    %v1138 = vadd.f32 %v1134, %v1137
    %s1139 = sld [smem:[#allocation2 + $0x116]]
    %v1140 = vstv %s1139
    %v1141 = vmul.f32 %v1140, %v940
    %v1142 = vadd.f32 %v1138, %v1141
    %s1143 = sld [smem:[#allocation2 + $0x117]]
    %v1144 = vstv %s1143
    %v1145 = vmul.f32 %v1144, %v1007
    %v1146 = vadd.f32 %v1142, %v1145
    %v1147 = vmax.f32 %v1146, 0.0
    %s1148 = sld [smem:[#allocation2 + $0x13c]]
    %v1149 = vstv %s1148
    %s1150 = sld [smem:[#allocation2 + $0x118]]
    %v1151 = vstv %s1150
    %v1152 = vmul.f32 %v1151, %v538
    %v1153 = vadd.f32 %v1149, %v1152
    %s1154 = sld [smem:[#allocation2 + $0x119]]
    %v1155 = vstv %s1154
    %v1156 = vmul.f32 %v1155, %v605
    %v1157 = vadd.f32 %v1153, %v1156
    %s1158 = sld [smem:[#allocation2 + $0x11a]]
    %v1159 = vstv %s1158
    %v1160 = vmul.f32 %v1159, %v672
    %v1161 = vadd.f32 %v1157, %v1160
    %s1162 = sld [smem:[#allocation2 + $0x11b]]
    %v1163 = vstv %s1162
    %v1164 = vmul.f32 %v1163, %v739
    %v1165 = vadd.f32 %v1161, %v1164
    %s1166 = sld [smem:[#allocation2 + $0x11c]]
    %v1167 = vstv %s1166
    %v1168 = vmul.f32 %v1167, %v806
    %v1169 = vadd.f32 %v1165, %v1168
    %s1170 = sld [smem:[#allocation2 + $0x11d]]
    %v1171 = vstv %s1170
    %v1172 = vmul.f32 %v1171, %v873
    %v1173 = vadd.f32 %v1169, %v1172
    %s1174 = sld [smem:[#allocation2 + $0x11e]]
    %v1175 = vstv %s1174
    %v1176 = vmul.f32 %v1175, %v940
    %v1177 = vadd.f32 %v1173, %v1176
    %s1178 = sld [smem:[#allocation2 + $0x11f]]
    %v1179 = vstv %s1178
    %v1180 = vmul.f32 %v1179, %v1007
    %v1181 = vadd.f32 %v1177, %v1180
    %v1182 = vmax.f32 %v1181, 0.0
    %s1183 = sld [smem:[#allocation2 + $0x13d]]
    %v1184 = vstv %s1183
    %s1185 = sld [smem:[#allocation2 + $0x120]]
    %v1186 = vstv %s1185
    %v1187 = vmul.f32 %v1186, %v538
    %v1188 = vadd.f32 %v1184, %v1187
    %s1189 = sld [smem:[#allocation2 + $0x121]]
    %v1190 = vstv %s1189
    %v1191 = vmul.f32 %v1190, %v605
    %v1192 = vadd.f32 %v1188, %v1191
    %s1193 = sld [smem:[#allocation2 + $0x122]]
    %v1194 = vstv %s1193
    %v1195 = vmul.f32 %v1194, %v672
    %v1196 = vadd.f32 %v1192, %v1195
    %s1197 = sld [smem:[#allocation2 + $0x123]]
    %v1198 = vstv %s1197
    %v1199 = vmul.f32 %v1198, %v739
    %v1200 = vadd.f32 %v1196, %v1199
    %s1201 = sld [smem:[#allocation2 + $0x124]]
    %v1202 = vstv %s1201
    %v1203 = vmul.f32 %v1202, %v806
    %v1204 = vadd.f32 %v1200, %v1203
    %s1205 = sld [smem:[#allocation2 + $0x125]]
    %v1206 = vstv %s1205
    %v1207 = vmul.f32 %v1206, %v873
    %v1208 = vadd.f32 %v1204, %v1207
    %s1209 = sld [smem:[#allocation2 + $0x126]]
    %v1210 = vstv %s1209
    %v1211 = vmul.f32 %v1210, %v940
    %v1212 = vadd.f32 %v1208, %v1211
    %s1213 = sld [smem:[#allocation2 + $0x127]]
    %v1214 = vstv %s1213
    %v1215 = vmul.f32 %v1214, %v1007
    %v1216 = vadd.f32 %v1212, %v1215
    %v1217 = vmax.f32 %v1216, 0.0
    %s1218 = sld [smem:[#allocation2 + $0x13e]]
    %v1219 = vstv %s1218
    %s1220 = sld [smem:[#allocation2 + $0x128]]
    %v1221 = vstv %s1220
    %v1222 = vmul.f32 %v1221, %v538
    %v1223 = vadd.f32 %v1219, %v1222
    %s1224 = sld [smem:[#allocation2 + $0x129]]
    %v1225 = vstv %s1224
    %v1226 = vmul.f32 %v1225, %v605
    %v1227 = vadd.f32 %v1223, %v1226
    %s1228 = sld [smem:[#allocation2 + $0x12a]]
    %v1229 = vstv %s1228
    %v1230 = vmul.f32 %v1229, %v672
    %v1231 = vadd.f32 %v1227, %v1230
    %s1232 = sld [smem:[#allocation2 + $0x12b]]
    %v1233 = vstv %s1232
    %v1234 = vmul.f32 %v1233, %v739
    %v1235 = vadd.f32 %v1231, %v1234
    %s1236 = sld [smem:[#allocation2 + $0x12c]]
    %v1237 = vstv %s1236
    %v1238 = vmul.f32 %v1237, %v806
    %v1239 = vadd.f32 %v1235, %v1238
    %s1240 = sld [smem:[#allocation2 + $0x12d]]
    %v1241 = vstv %s1240
    %v1242 = vmul.f32 %v1241, %v873
    %v1243 = vadd.f32 %v1239, %v1242
    %s1244 = sld [smem:[#allocation2 + $0x12e]]
    %v1245 = vstv %s1244
    %v1246 = vmul.f32 %v1245, %v940
    %v1247 = vadd.f32 %v1243, %v1246
    %s1248 = sld [smem:[#allocation2 + $0x12f]]
    %v1249 = vstv %s1248
    %v1250 = vmul.f32 %v1249, %v1007
    %v1251 = vadd.f32 %v1247, %v1250
    %v1252 = vmax.f32 %v1251, 0.0
    %s1253 = sld [smem:[#allocation2 + $0x13f]]
    %v1254 = vstv %s1253
    %s1255 = sld [smem:[#allocation2 + $0x130]]
    %v1256 = vstv %s1255
    %v1257 = vmul.f32 %v1256, %v538
    %v1258 = vadd.f32 %v1254, %v1257
    %s1259 = sld [smem:[#allocation2 + $0x131]]
    %v1260 = vstv %s1259
    %v1261 = vmul.f32 %v1260, %v605
    %v1262 = vadd.f32 %v1258, %v1261
    %s1263 = sld [smem:[#allocation2 + $0x132]]
    %v1264 = vstv %s1263
    %v1265 = vmul.f32 %v1264, %v672
    %v1266 = vadd.f32 %v1262, %v1265
    %s1267 = sld [smem:[#allocation2 + $0x133]]
    %v1268 = vstv %s1267
    %v1269 = vmul.f32 %v1268, %v739
    %v1270 = vadd.f32 %v1266, %v1269
    %s1271 = sld [smem:[#allocation2 + $0x134]]
    %v1272 = vstv %s1271
    %v1273 = vmul.f32 %v1272, %v806
    %v1274 = vadd.f32 %v1270, %v1273
    %s1275 = sld [smem:[#allocation2 + $0x135]]
    %v1276 = vstv %s1275
    %v1277 = vmul.f32 %v1276, %v873
    %v1278 = vadd.f32 %v1274, %v1277
    %s1279 = sld [smem:[#allocation2 + $0x136]]
    %v1280 = vstv %s1279
    %v1281 = vmul.f32 %v1280, %v940
    %v1282 = vadd.f32 %v1278, %v1281
    %s1283 = sld [smem:[#allocation2 + $0x137]]
    %v1284 = vstv %s1283
    %v1285 = vmul.f32 %v1284, %v1007
    %v1286 = vadd.f32 %v1282, %v1285
    %v1287 = vmax.f32 %v1286, 0.0
    %s1288 = sld [smem:[#allocation2 + $0x148]]
    %v1289 = vstv %s1288
    %s1290 = sld [smem:[#allocation2 + $0x140]]
    %v1291 = vstv %s1290
    %v1292 = vmul.f32 %v1291, %v1042
    %v1293 = vadd.f32 %v1289, %v1292
    %s1294 = sld [smem:[#allocation2 + $0x141]]
    %v1295 = vstv %s1294
    %v1296 = vmul.f32 %v1295, %v1077
    %v1297 = vadd.f32 %v1293, %v1296
    %s1298 = sld [smem:[#allocation2 + $0x142]]
    %v1299 = vstv %s1298
    %v1300 = vmul.f32 %v1299, %v1112
    %v1301 = vadd.f32 %v1297, %v1300
    %s1302 = sld [smem:[#allocation2 + $0x143]]
    %v1303 = vstv %s1302
    %v1304 = vmul.f32 %v1303, %v1147
    %v1305 = vadd.f32 %v1301, %v1304
    %s1306 = sld [smem:[#allocation2 + $0x144]]
    %v1307 = vstv %s1306
    %v1308 = vmul.f32 %v1307, %v1182
    %v1309 = vadd.f32 %v1305, %v1308
    %s1310 = sld [smem:[#allocation2 + $0x145]]
    %v1311 = vstv %s1310
    %v1312 = vmul.f32 %v1311, %v1217
    %v1313 = vadd.f32 %v1309, %v1312
    %s1314 = sld [smem:[#allocation2 + $0x146]]
    %v1315 = vstv %s1314
    %v1316 = vmul.f32 %v1315, %v1252
    %v1317 = vadd.f32 %v1313, %v1316
    %s1318 = sld [smem:[#allocation2 + $0x147]]
    %v1319 = vstv %s1318
    %v1320 = vmul.f32 %v1319, %v1287
    %v1321 = vadd.f32 %v1317, %v1320
    %v1322 = vmul.f32 %v1321, 1.442695
    %v1323 = vpow.pop %v1322
    %v1324 = vadd.f32 %v1323, 1.0
    %v1325 = vrcp.pop %v1324
    %v1326 = vmul.f32 1.0, %v1325
    %1327 = vst [vmem:[%s2] sm:$0xff] %v1326
    // Predicated region
    $region14: #{eorp_forward.1} parent=1 // pred_check
      _
    $region15: #{eorp_forward.1} parent=1 // pred_check_branch
      %1329 = sbr.rel (0) target = $region17
    $region16: #{eorp_forward.1} parent=1 // pred_region
      _
    $region17: #{eorp_forward.1} parent=1 // pred_fallthru
      _
    // Predicated region
    $region18: #{eorp_forward.1} parent=1 // pred_check
      _
    $region19: #{eorp_forward.1} parent=1 // pred_check_branch
      %1331 = sbr.rel (0) target = $region21
    $region20: #{eorp_forward.1} parent=1 // pred_region
      _
    $region21: #{eorp_forward.1} parent=1 // pred_fallthru
      _
    %1332 = vsyncpa [#allocation3], 1

</llo_original>
